<compile_context>
chip_gen: v7x
topology: tpu7x:2x2x1
jax: 0.10.0
libtpu: 0.0.40
codegen_flags: <defaults>
</compile_context>

<pallas_src>
import functools

import jax
import jax.numpy as jnp
from jax.experimental import pallas as pl
from jax.experimental.pallas import tpu as pltpu

KS = 7           # kernel_size
PAD = KS // 2    # padding = 3


def _round_up(x, m):
    return ((x + m - 1) // m) * m


def _spatial_attention_kernel(w_ref, x_ref, o_ref, sum_ref, max_ref, *, C, H, W):
    # w_ref   : SMEM f32[2*KS*KS]      flattened conv1 weight (OIHW, O=1)
    # x_ref   : VMEM  [TB, TC, HWp]    one (batch tile, channel tile) block
    # o_ref   : VMEM  [TB, HWp]        sigmoid(conv(...)), written on last kc
    # sum_ref : VMEM f32[TB, HWp]      channel-sum accumulator (scratch)
    # max_ref : VMEM f32[TB, HWp]      channel-max accumulator (scratch)
    TB, TC, HWp = x_ref.shape
    kc = pl.program_id(1)
    last = pl.num_programs(1) - 1

    # ---- streaming channel reduce (<=8 channels live at a time) -------------
    c0_end = min(8, TC)
    xc = x_ref[:, 0:c0_end, :].astype(jnp.float32)
    bsum = jnp.sum(xc, axis=1)
    bmax = jnp.max(xc, axis=1)
    for c0 in range(8, TC, 8):
        cc = min(8, TC - c0)
        xc = x_ref[:, c0:c0 + cc, :].astype(jnp.float32)
        bsum = bsum + jnp.sum(xc, axis=1)
        bmax = jnp.maximum(bmax, jnp.max(xc, axis=1))

    @pl.when(kc == 0)
    def _():
        sum_ref[...] = bsum
        max_ref[...] = bmax

    @pl.when(kc != 0)
    def _():
        sum_ref[...] = sum_ref[...] + bsum
        max_ref[...] = jnp.maximum(max_ref[...], bmax)

    # ---- 7x7 conv (+ sigmoid) on the last channel step ----------------------
    @pl.when(kc == last)
    def _():
        # sum * (1/C) differs from a true mean only by one rounding step
        # (exact for power-of-two C); within test tolerance.
        avg = sum_ref[...] * (1.0 / C)
        mx = max_ref[...]

        # Per-lane column / row indices of the flattened spatial map, built
        # once; bit ops when W is a power of two (no VPU integer div).
        lane = jax.lax.broadcasted_iota(jnp.int32, (1, HWp), 1)
        if (W & (W - 1)) == 0:
            col = lane & (W - 1)
            row = lane >> (W.bit_length() - 1)
        else:
            col = lane % W          # TODO(synk): general-W path uses int div/mod
            row = lane // W

        KS2 = KS * KS

        # Outer loop over column offsets: each column-shifted map (XLU roll +
        # where-mask realizing the W zero padding) is consumed immediately by
        # scalar MACs into 7 per-kernel-row accumulators.
        row_acc = [None] * KS
        for j in range(KS):
            dj = j - PAD
            if dj == 0:
                ca, cm = avg, mx
            else:
                cmask = (col < (W - dj)) if dj > 0 else (col >= (-dj))
                sh = (-dj) % HWp
                ca = jnp.where(cmask, pltpu.roll(avg, shift=sh, axis=1), 0.0)
                cm = jnp.where(cmask, pltpu.roll(mx, shift=sh, axis=1), 0.0)
            for i in range(KS):
                t = w_ref[i * KS + j] * ca + w_ref[KS2 + i * KS + j] * cm
                row_acc[i] = t if row_acc[i] is None else row_acc[i] + t

        # One whole-row shift per kernel row (roll by (i-PAD)*W, masked on the
        # output row index) realizes the H zero padding.
        acc = None
        for i in range(KS):
            di = i - PAD
            if di == 0:
                contrib = row_acc[i]
            else:
                rmask = (row < (H - di)) if di > 0 else (row >= (-di))
                sh = (-di * W) % HWp
                contrib = jnp.where(
                    rmask, pltpu.roll(row_acc[i], shift=sh, axis=1), 0.0)
            acc = contrib if acc is None else acc + contrib

        o_ref[...] = jax.nn.sigmoid(acc).astype(o_ref.dtype)


def _pick_channel_tile(C, cap=32):
    """Channel tile that divides C: full C when small, else a multiple of 8."""
    if C <= cap:
        return C
    best = 0
    for tc in range(8, cap + 1, 8):
        if C % tc == 0:
            best = tc
    return best if best > 0 else C


def _pick_batch_tile(N, TC, HWp, itemsize, budget_bytes=20 * 1024 * 1024):
    """Batch tile + padded batch size, budgeting ALL per-sample VMEM."""
    tc_pad = _round_up(TC, 8)
    per_sample = (2 * tc_pad * HWp * itemsize   # x block, double-buffered
                  + 2 * HWp * 4                 # output block
                  + 2 * HWp * 4                 # sum/max scratch accumulators
                  + 12 * HWp * 4)               # live f32 conv intermediates
    cap = max(1, budget_bytes // per_sample)
    if N >= 16:
        cap = min(cap, N // 2)                  # >=2 grid steps => both v7x cores
    if cap >= N:
        return N, N                             # single step, full batch (legal block)
    tb = max(8, (cap // 8) * 8)                 # multiple of 8: dense sublane stores
    n_pad = _round_up(N, tb)                    # non-divisor N handled by padding
    return tb, n_pad


def spatial_attention(x, weight):
    """x: [N, C, H, W], weight: [1, 2, KS, KS] -> [N, 1, H, W]."""
    N, C, H, W = x.shape
    HW = H * W
    HWp = _round_up(HW, 128)                    # lane-dense spatial axis

    w_flat = weight.reshape(-1).astype(jnp.float32)     # [2*KS*KS], OIHW order

    TC = _pick_channel_tile(C)
    TB, N_pad = _pick_batch_tile(N, TC, HWp, x.dtype.itemsize)

    x_flat = x.reshape(N, C, HW)                # free (row-major) reshape
    if (N_pad != N) or (HWp != HW):
        x_flat = jnp.pad(x_flat, ((0, N_pad - N), (0, 0), (0, HWp - HW)))

    kernel = functools.partial(_spatial_attention_kernel, C=C, H=H, W=W)

    cost = pl.CostEstimate(
        flops=int(N * HW * (2 * C + 4 * KS * KS)),
        transcendentals=int(N * HW),
        bytes_accessed=int(x.size * x.dtype.itemsize
                           + N * HW * x.dtype.itemsize
                           + w_flat.size * 4),
    )

    out = pl.pallas_call(
        kernel,
        out_shape=jax.ShapeDtypeStruct((N_pad, HWp), x.dtype),
        grid_spec=pltpu.PrefetchScalarGridSpec(
            num_scalar_prefetch=0,
            grid=(N_pad // TB, C // TC),
            in_specs=[
                # Small weight vector in SMEM (scalar reads in the MAC loop).
                pl.BlockSpec(memory_space=pltpu.MemorySpace.SMEM),
                # One (batch tile, channel tile) block per grid step.
                pl.BlockSpec((TB, TC, HWp), lambda nb, kc: (nb, kc, 0)),
            ],
            # Output block is resident across the channel (reduction) axis.
            out_specs=pl.BlockSpec((TB, HWp), lambda nb, kc: (nb, 0)),
            scratch_shapes=[pltpu.VMEM((TB, HWp), jnp.float32),
                            pltpu.VMEM((TB, HWp), jnp.float32)],
        ),
        compiler_params=pltpu.CompilerParams(
            dimension_semantics=("parallel", "arbitrary"),
            vmem_limit_bytes=32 * 1024 * 1024),
        cost_estimate=cost,
    )(w_flat, x_flat)

    return out[:N, :HW].reshape(N, 1, H, W)


def _reference(x, weight):
    avg = jnp.mean(x, axis=1, keepdims=True)
    mx = jnp.max(x, axis=1, keepdims=True)
    xc = jnp.concatenate([avg, mx], axis=1)
    out = jax.lax.conv_general_dilated(
        xc, weight, window_strides=(1, 1),
        padding=((PAD, PAD), (PAD, PAD)),
        dimension_numbers=("NCHW", "OIHW", "NCHW"))
    return jax.nn.sigmoid(out)


if __name__ == "__main__":
    key = jax.random.PRNGKey(0)
    kx, kw = jax.random.split(key)

    N, C, H, W = 2, 4, 16, 16
    x = jax.random.normal(kx, (N, C, H, W), dtype=jnp.float32)
    # Deterministic conv1 weight: Conv2d(2, 1, 7, bias=False) -> (1, 2, 7, 7)
    weight = 0.1 * jax.random.normal(kw, (1, 2, KS, KS), dtype=jnp.float32)

    out = spatial_attention(x, weight)
    out = jax.block_until_ready(out)

    ref = _reference(x, weight)
    assert out.shape == (N, 1, H, W)
    assert jnp.allclose(out, ref, atol=1e-5, rtol=1e-5), float(
        jnp.max(jnp.abs(out - ref)))

    print("KERNEL_OK")
</pallas_src>

<mosaic_0001>
module attributes {stable_mosaic.version = 11 : i64} {
  func.func @_spatial_attention_kernel(%arg0: i32, %arg1: i32, %arg2: memref<98xf32, #tpu.memory_space<smem>>, %arg3: memref<2x4x256xf32, #tpu.memory_space<vmem>>, %arg4: memref<2x256xf32, #tpu.memory_space<vmem>>, %arg5: memref<2x256xf32, #tpu.memory_space<vmem>>, %arg6: memref<2x256xf32, #tpu.memory_space<vmem>>) attributes {dimension_semantics = [#tpu.dimension_semantics<parallel>, #tpu.dimension_semantics<arbitrary>], iteration_bounds = array<i64: 1, 1>, scalar_prefetch = 0 : i64, scratch_operands = 2 : i64, tpu.core_type = #tpu.core_type<tc>, window_params = [{transform_indices = @transform_0, window_bounds = array<i64: 98>}, {transform_indices = @transform_1, window_bounds = array<i64: 2, 4, 256>}, {transform_indices = @transform_2, window_bounds = array<i64: 2, 256>}]} {
    %c0 = arith.constant 0 : index
    %c0_0 = arith.constant 0 : index
    %c0_1 = arith.constant 0 : index
    %0 = vector.load %arg3[%c0, %c0_0, %c0_1] : memref<2x4x256xf32, #tpu.memory_space<vmem>>, vector<2x4x256xf32>
    %cst = arith.constant dense<0.000000e+00> : vector<2x256xf32>
    %1 = vector.multi_reduction <add>, %0, %cst [1] : vector<2x4x256xf32> to vector<2x256xf32>
    %cst_2 = arith.constant dense<0xFF800000> : vector<2x256xf32>
    %2 = vector.multi_reduction <maximumf>, %0, %cst_2 [1] : vector<2x4x256xf32> to vector<2x256xf32>
    %c0_i32 = arith.constant 0 : i32
    %3 = arith.cmpi eq, %arg1, %c0_i32 : i32
    %4 = arith.extui %3 : i1 to i32
    %c0_i32_3 = arith.constant 0 : i32
    %5 = arith.cmpi ne, %4, %c0_i32_3 : i32
    scf.if %5 {
      %c0_8 = arith.constant 0 : index
      %c0_9 = arith.constant 0 : index
      %12 = vector.load %arg5[%c0_8, %c0_9] : memref<2x256xf32, #tpu.memory_space<vmem>>, vector<2x256xf32>
      tpu.vector_store %arg5[%c0_8, %c0_9], %1 {strides = array<i32>} : memref<2x256xf32, #tpu.memory_space<vmem>>, vector<2x256xf32>,
      %c0_10 = arith.constant 0 : index
      %c0_11 = arith.constant 0 : index
      %13 = vector.load %arg6[%c0_10, %c0_11] : memref<2x256xf32, #tpu.memory_space<vmem>>, vector<2x256xf32>
      tpu.vector_store %arg6[%c0_10, %c0_11], %2 {strides = array<i32>} : memref<2x256xf32, #tpu.memory_space<vmem>>, vector<2x256xf32>,
    } else {
    }
    %c0_i32_4 = arith.constant 0 : i32
    %6 = arith.cmpi ne, %arg1, %c0_i32_4 : i32
    %7 = arith.extui %6 : i1 to i32
    %c0_i32_5 = arith.constant 0 : i32
    %8 = arith.cmpi ne, %7, %c0_i32_5 : i32
    scf.if %8 {
      %c0_8 = arith.constant 0 : index
      %c0_9 = arith.constant 0 : index
      %12 = vector.load %arg5[%c0_8, %c0_9] : memref<2x256xf32, #tpu.memory_space<vmem>>, vector<2x256xf32>
      %13 = arith.addf %12, %1 : vector<2x256xf32>
      %c0_10 = arith.constant 0 : index
      %c0_11 = arith.constant 0 : index
      %14 = vector.load %arg5[%c0_10, %c0_11] : memref<2x256xf32, #tpu.memory_space<vmem>>, vector<2x256xf32>
      tpu.vector_store %arg5[%c0_10, %c0_11], %13 {strides = array<i32>} : memref<2x256xf32, #tpu.memory_space<vmem>>, vector<2x256xf32>,
      %c0_12 = arith.constant 0 : index
      %c0_13 = arith.constant 0 : index
      %15 = vector.load %arg6[%c0_12, %c0_13] : memref<2x256xf32, #tpu.memory_space<vmem>>, vector<2x256xf32>
      %16 = arith.maximumf %15, %2 : vector<2x256xf32>
      %c0_14 = arith.constant 0 : index
      %c0_15 = arith.constant 0 : index
      %17 = vector.load %arg6[%c0_14, %c0_15] : memref<2x256xf32, #tpu.memory_space<vmem>>, vector<2x256xf32>
      tpu.vector_store %arg6[%c0_14, %c0_15], %16 {strides = array<i32>} : memref<2x256xf32, #tpu.memory_space<vmem>>, vector<2x256xf32>,
    } else {
    }
    %c0_i32_6 = arith.constant 0 : i32
    %9 = arith.cmpi eq, %arg1, %c0_i32_6 : i32
    %10 = arith.extui %9 : i1 to i32
    %c0_i32_7 = arith.constant 0 : i32
    %11 = arith.cmpi ne, %10, %c0_i32_7 : i32
    scf.if %11 {
      %c0_8 = arith.constant 0 : index
      %c0_9 = arith.constant 0 : index
      %12 = vector.load %arg5[%c0_8, %c0_9] : memref<2x256xf32, #tpu.memory_space<vmem>>, vector<2x256xf32>
      %cst_10 = arith.constant 2.500000e-01 : f32
      %13 = vector.broadcast %cst_10 : f32 to vector<2x256xf32>
      %14 = arith.mulf %12, %13 : vector<2x256xf32>
      %c0_11 = arith.constant 0 : index
      %c0_12 = arith.constant 0 : index
      %15 = vector.load %arg6[%c0_11, %c0_12] : memref<2x256xf32, #tpu.memory_space<vmem>>, vector<2x256xf32>
      %16 = tpu.iota {dimensions = array<i32: 1>} : vector<1x256xi32>
      %c15_i32 = arith.constant 15 : i32
      %17 = vector.broadcast %c15_i32 : i32 to vector<1x256xi32>
      %18 = arith.andi %16, %17 : vector<1x256xi32>
      %c4_i32 = arith.constant 4 : i32
      %19 = vector.broadcast %c4_i32 : i32 to vector<1x256xi32>
      %20 = arith.shrsi %16, %19 : vector<1x256xi32>
      %c3_i32 = arith.constant 3 : i32
      %21 = vector.broadcast %c3_i32 : i32 to vector<1x256xi32>
      %22 = arith.cmpi sge, %18, %21 : vector<1x256xi32>
      %c3_i32_13 = arith.constant 3 : i32
      %23 = tpu.dynamic_rotate %14 by %c3_i32_13 dim 1 : vector<2x256xf32>, i32 -> vector<2x256xf32>
      %cst_14 = arith.constant 0.000000e+00 : f32
      %24 = vector.shape_cast %22 : vector<1x256xi1> to vector<1x256xi1>
      %25 = vector.broadcast %24 : vector<1x256xi1> to vector<2x256xi1>
      %26 = vector.broadcast %cst_14 : f32 to vector<2x256xf32>
      %27 = arith.select %25, %23, %26 : vector<2x256xi1>, vector<2x256xf32>
      %c3_i32_15 = arith.constant 3 : i32
      %28 = tpu.dynamic_rotate %15 by %c3_i32_15 dim 1 : vector<2x256xf32>, i32 -> vector<2x256xf32>
      %cst_16 = arith.constant 0.000000e+00 : f32
      %29 = vector.shape_cast %22 : vector<1x256xi1> to vector<1x256xi1>
      %30 = vector.broadcast %29 : vector<1x256xi1> to vector<2x256xi1>
      %31 = vector.broadcast %cst_16 : f32 to vector<2x256xf32>
      %32 = arith.select %30, %28, %31 : vector<2x256xi1>, vector<2x256xf32>
      %c0_17 = arith.constant 0 : index
      %33 = memref.load %arg2[%c0_17] : memref<98xf32, #tpu.memory_space<smem>>
      %34 = vector.broadcast %33 : f32 to vector<2x256xf32>
      %35 = arith.mulf %34, %27 : vector<2x256xf32>
      %c49 = arith.constant 49 : index
      %36 = memref.load %arg2[%c49] : memref<98xf32, #tpu.memory_space<smem>>
      %37 = vector.broadcast %36 : f32 to vector<2x256xf32>
      %38 = arith.mulf %37, %32 : vector<2x256xf32>
      %39 = arith.addf %35, %38 : vector<2x256xf32>
      %c7 = arith.constant 7 : index
      %40 = memref.load %arg2[%c7] : memref<98xf32, #tpu.memory_space<smem>>
      %41 = vector.broadcast %40 : f32 to vector<2x256xf32>
      %42 = arith.mulf %41, %27 : vector<2x256xf32>
      %c56 = arith.constant 56 : index
      %43 = memref.load %arg2[%c56] : memref<98xf32, #tpu.memory_space<smem>>
      %44 = vector.broadcast %43 : f32 to vector<2x256xf32>
      %45 = arith.mulf %44, %32 : vector<2x256xf32>
      %46 = arith.addf %42, %45 : vector<2x256xf32>
      %c14 = arith.constant 14 : index
      %47 = memref.load %arg2[%c14] : memref<98xf32, #tpu.memory_space<smem>>
      %48 = vector.broadcast %47 : f32 to vector<2x256xf32>
      %49 = arith.mulf %48, %27 : vector<2x256xf32>
      %c63 = arith.constant 63 : index
      %50 = memref.load %arg2[%c63] : memref<98xf32, #tpu.memory_space<smem>>
      %51 = vector.broadcast %50 : f32 to vector<2x256xf32>
      %52 = arith.mulf %51, %32 : vector<2x256xf32>
      %53 = arith.addf %49, %52 : vector<2x256xf32>
      %c21 = arith.constant 21 : index
      %54 = memref.load %arg2[%c21] : memref<98xf32, #tpu.memory_space<smem>>
      %55 = vector.broadcast %54 : f32 to vector<2x256xf32>
      %56 = arith.mulf %55, %27 : vector<2x256xf32>
      %c70 = arith.constant 70 : index
      %57 = memref.load %arg2[%c70] : memref<98xf32, #tpu.memory_space<smem>>
      %58 = vector.broadcast %57 : f32 to vector<2x256xf32>
      %59 = arith.mulf %58, %32 : vector<2x256xf32>
      %60 = arith.addf %56, %59 : vector<2x256xf32>
      %c28 = arith.constant 28 : index
      %61 = memref.load %arg2[%c28] : memref<98xf32, #tpu.memory_space<smem>>
      %62 = vector.broadcast %61 : f32 to vector<2x256xf32>
      %63 = arith.mulf %62, %27 : vector<2x256xf32>
      %c77 = arith.constant 77 : index
      %64 = memref.load %arg2[%c77] : memref<98xf32, #tpu.memory_space<smem>>
      %65 = vector.broadcast %64 : f32 to vector<2x256xf32>
      %66 = arith.mulf %65, %32 : vector<2x256xf32>
      %67 = arith.addf %63, %66 : vector<2x256xf32>
      %c35 = arith.constant 35 : index
      %68 = memref.load %arg2[%c35] : memref<98xf32, #tpu.memory_space<smem>>
      %69 = vector.broadcast %68 : f32 to vector<2x256xf32>
      %70 = arith.mulf %69, %27 : vector<2x256xf32>
      %c84 = arith.constant 84 : index
      %71 = memref.load %arg2[%c84] : memref<98xf32, #tpu.memory_space<smem>>
      %72 = vector.broadcast %71 : f32 to vector<2x256xf32>
      %73 = arith.mulf %72, %32 : vector<2x256xf32>
      %74 = arith.addf %70, %73 : vector<2x256xf32>
      %c42 = arith.constant 42 : index
      %75 = memref.load %arg2[%c42] : memref<98xf32, #tpu.memory_space<smem>>
      %76 = vector.broadcast %75 : f32 to vector<2x256xf32>
      %77 = arith.mulf %76, %27 : vector<2x256xf32>
      %c91 = arith.constant 91 : index
      %78 = memref.load %arg2[%c91] : memref<98xf32, #tpu.memory_space<smem>>
      %79 = vector.broadcast %78 : f32 to vector<2x256xf32>
      %80 = arith.mulf %79, %32 : vector<2x256xf32>
      %81 = arith.addf %77, %80 : vector<2x256xf32>
      %c2_i32 = arith.constant 2 : i32
      %82 = vector.broadcast %c2_i32 : i32 to vector<1x256xi32>
      %83 = arith.cmpi sge, %18, %82 : vector<1x256xi32>
      %c2_i32_18 = arith.constant 2 : i32
      %84 = tpu.dynamic_rotate %14 by %c2_i32_18 dim 1 : vector<2x256xf32>, i32 -> vector<2x256xf32>
      %cst_19 = arith.constant 0.000000e+00 : f32
      %85 = vector.shape_cast %83 : vector<1x256xi1> to vector<1x256xi1>
      %86 = vector.broadcast %85 : vector<1x256xi1> to vector<2x256xi1>
      %87 = vector.broadcast %cst_19 : f32 to vector<2x256xf32>
      %88 = arith.select %86, %84, %87 : vector<2x256xi1>, vector<2x256xf32>
      %c2_i32_20 = arith.constant 2 : i32
      %89 = tpu.dynamic_rotate %15 by %c2_i32_20 dim 1 : vector<2x256xf32>, i32 -> vector<2x256xf32>
      %cst_21 = arith.constant 0.000000e+00 : f32
      %90 = vector.shape_cast %83 : vector<1x256xi1> to vector<1x256xi1>
      %91 = vector.broadcast %90 : vector<1x256xi1> to vector<2x256xi1>
      %92 = vector.broadcast %cst_21 : f32 to vector<2x256xf32>
      %93 = arith.select %91, %89, %92 : vector<2x256xi1>, vector<2x256xf32>
      %c1 = arith.constant 1 : index
      %94 = memref.load %arg2[%c1] : memref<98xf32, #tpu.memory_space<smem>>
      %95 = vector.broadcast %94 : f32 to vector<2x256xf32>
      %96 = arith.mulf %95, %88 : vector<2x256xf32>
      %c50 = arith.constant 50 : index
      %97 = memref.load %arg2[%c50] : memref<98xf32, #tpu.memory_space<smem>>
      %98 = vector.broadcast %97 : f32 to vector<2x256xf32>
      %99 = arith.mulf %98, %93 : vector<2x256xf32>
      %100 = arith.addf %96, %99 : vector<2x256xf32>
      %101 = arith.addf %39, %100 : vector<2x256xf32>
      %c8 = arith.constant 8 : index
      %102 = memref.load %arg2[%c8] : memref<98xf32, #tpu.memory_space<smem>>
      %103 = vector.broadcast %102 : f32 to vector<2x256xf32>
      %104 = arith.mulf %103, %88 : vector<2x256xf32>
      %c57 = arith.constant 57 : index
      %105 = memref.load %arg2[%c57] : memref<98xf32, #tpu.memory_space<smem>>
      %106 = vector.broadcast %105 : f32 to vector<2x256xf32>
      %107 = arith.mulf %106, %93 : vector<2x256xf32>
      %108 = arith.addf %104, %107 : vector<2x256xf32>
      %109 = arith.addf %46, %108 : vector<2x256xf32>
      %c15 = arith.constant 15 : index
      %110 = memref.load %arg2[%c15] : memref<98xf32, #tpu.memory_space<smem>>
      %111 = vector.broadcast %110 : f32 to vector<2x256xf32>
      %112 = arith.mulf %111, %88 : vector<2x256xf32>
      %c64 = arith.constant 64 : index
      %113 = memref.load %arg2[%c64] : memref<98xf32, #tpu.memory_space<smem>>
      %114 = vector.broadcast %113 : f32 to vector<2x256xf32>
      %115 = arith.mulf %114, %93 : vector<2x256xf32>
      %116 = arith.addf %112, %115 : vector<2x256xf32>
      %117 = arith.addf %53, %116 : vector<2x256xf32>
      %c22 = arith.constant 22 : index
      %118 = memref.load %arg2[%c22] : memref<98xf32, #tpu.memory_space<smem>>
      %119 = vector.broadcast %118 : f32 to vector<2x256xf32>
      %120 = arith.mulf %119, %88 : vector<2x256xf32>
      %c71 = arith.constant 71 : index
      %121 = memref.load %arg2[%c71] : memref<98xf32, #tpu.memory_space<smem>>
      %122 = vector.broadcast %121 : f32 to vector<2x256xf32>
      %123 = arith.mulf %122, %93 : vector<2x256xf32>
      %124 = arith.addf %120, %123 : vector<2x256xf32>
      %125 = arith.addf %60, %124 : vector<2x256xf32>
      %c29 = arith.constant 29 : index
      %126 = memref.load %arg2[%c29] : memref<98xf32, #tpu.memory_space<smem>>
      %127 = vector.broadcast %126 : f32 to vector<2x256xf32>
      %128 = arith.mulf %127, %88 : vector<2x256xf32>
      %c78 = arith.constant 78 : index
      %129 = memref.load %arg2[%c78] : memref<98xf32, #tpu.memory_space<smem>>
      %130 = vector.broadcast %129 : f32 to vector<2x256xf32>
      %131 = arith.mulf %130, %93 : vector<2x256xf32>
      %132 = arith.addf %128, %131 : vector<2x256xf32>
      %133 = arith.addf %67, %132 : vector<2x256xf32>
      %c36 = arith.constant 36 : index
      %134 = memref.load %arg2[%c36] : memref<98xf32, #tpu.memory_space<smem>>
      %135 = vector.broadcast %134 : f32 to vector<2x256xf32>
      %136 = arith.mulf %135, %88 : vector<2x256xf32>
      %c85 = arith.constant 85 : index
      %137 = memref.load %arg2[%c85] : memref<98xf32, #tpu.memory_space<smem>>
      %138 = vector.broadcast %137 : f32 to vector<2x256xf32>
      %139 = arith.mulf %138, %93 : vector<2x256xf32>
      %140 = arith.addf %136, %139 : vector<2x256xf32>
      %141 = arith.addf %74, %140 : vector<2x256xf32>
      %c43 = arith.constant 43 : index
      %142 = memref.load %arg2[%c43] : memref<98xf32, #tpu.memory_space<smem>>
      %143 = vector.broadcast %142 : f32 to vector<2x256xf32>
      %144 = arith.mulf %143, %88 : vector<2x256xf32>
      %c92 = arith.constant 92 : index
      %145 = memref.load %arg2[%c92] : memref<98xf32, #tpu.memory_space<smem>>
      %146 = vector.broadcast %145 : f32 to vector<2x256xf32>
      %147 = arith.mulf %146, %93 : vector<2x256xf32>
      %148 = arith.addf %144, %147 : vector<2x256xf32>
      %149 = arith.addf %81, %148 : vector<2x256xf32>
      %c1_i32 = arith.constant 1 : i32
      %150 = vector.broadcast %c1_i32 : i32 to vector<1x256xi32>
      %151 = arith.cmpi sge, %18, %150 : vector<1x256xi32>
      %c1_i32_22 = arith.constant 1 : i32
      %152 = tpu.dynamic_rotate %14 by %c1_i32_22 dim 1 : vector<2x256xf32>, i32 -> vector<2x256xf32>
      %cst_23 = arith.constant 0.000000e+00 : f32
      %153 = vector.shape_cast %151 : vector<1x256xi1> to vector<1x256xi1>
      %154 = vector.broadcast %153 : vector<1x256xi1> to vector<2x256xi1>
      %155 = vector.broadcast %cst_23 : f32 to vector<2x256xf32>
      %156 = arith.select %154, %152, %155 : vector<2x256xi1>, vector<2x256xf32>
      %c1_i32_24 = arith.constant 1 : i32
      %157 = tpu.dynamic_rotate %15 by %c1_i32_24 dim 1 : vector<2x256xf32>, i32 -> vector<2x256xf32>
      %cst_25 = arith.constant 0.000000e+00 : f32
      %158 = vector.shape_cast %151 : vector<1x256xi1> to vector<1x256xi1>
      %159 = vector.broadcast %158 : vector<1x256xi1> to vector<2x256xi1>
      %160 = vector.broadcast %cst_25 : f32 to vector<2x256xf32>
      %161 = arith.select %159, %157, %160 : vector<2x256xi1>, vector<2x256xf32>
      %c2 = arith.constant 2 : index
      %162 = memref.load %arg2[%c2] : memref<98xf32, #tpu.memory_space<smem>>
      %163 = vector.broadcast %162 : f32 to vector<2x256xf32>
      %164 = arith.mulf %163, %156 : vector<2x256xf32>
      %c51 = arith.constant 51 : index
      %165 = memref.load %arg2[%c51] : memref<98xf32, #tpu.memory_space<smem>>
      %166 = vector.broadcast %165 : f32 to vector<2x256xf32>
      %167 = arith.mulf %166, %161 : vector<2x256xf32>
      %168 = arith.addf %164, %167 : vector<2x256xf32>
      %169 = arith.addf %101, %168 : vector<2x256xf32>
      %c9 = arith.constant 9 : index
      %170 = memref.load %arg2[%c9] : memref<98xf32, #tpu.memory_space<smem>>
      %171 = vector.broadcast %170 : f32 to vector<2x256xf32>
      %172 = arith.mulf %171, %156 : vector<2x256xf32>
      %c58 = arith.constant 58 : index
      %173 = memref.load %arg2[%c58] : memref<98xf32, #tpu.memory_space<smem>>
      %174 = vector.broadcast %173 : f32 to vector<2x256xf32>
      %175 = arith.mulf %174, %161 : vector<2x256xf32>
      %176 = arith.addf %172, %175 : vector<2x256xf32>
      %177 = arith.addf %109, %176 : vector<2x256xf32>
      %c16 = arith.constant 16 : index
      %178 = memref.load %arg2[%c16] : memref<98xf32, #tpu.memory_space<smem>>
      %179 = vector.broadcast %178 : f32 to vector<2x256xf32>
      %180 = arith.mulf %179, %156 : vector<2x256xf32>
      %c65 = arith.constant 65 : index
      %181 = memref.load %arg2[%c65] : memref<98xf32, #tpu.memory_space<smem>>
      %182 = vector.broadcast %181 : f32 to vector<2x256xf32>
      %183 = arith.mulf %182, %161 : vector<2x256xf32>
      %184 = arith.addf %180, %183 : vector<2x256xf32>
      %185 = arith.addf %117, %184 : vector<2x256xf32>
      %c23 = arith.constant 23 : index
      %186 = memref.load %arg2[%c23] : memref<98xf32, #tpu.memory_space<smem>>
      %187 = vector.broadcast %186 : f32 to vector<2x256xf32>
      %188 = arith.mulf %187, %156 : vector<2x256xf32>
      %c72 = arith.constant 72 : index
      %189 = memref.load %arg2[%c72] : memref<98xf32, #tpu.memory_space<smem>>
      %190 = vector.broadcast %189 : f32 to vector<2x256xf32>
      %191 = arith.mulf %190, %161 : vector<2x256xf32>
      %192 = arith.addf %188, %191 : vector<2x256xf32>
      %193 = arith.addf %125, %192 : vector<2x256xf32>
      %c30 = arith.constant 30 : index
      %194 = memref.load %arg2[%c30] : memref<98xf32, #tpu.memory_space<smem>>
      %195 = vector.broadcast %194 : f32 to vector<2x256xf32>
      %196 = arith.mulf %195, %156 : vector<2x256xf32>
      %c79 = arith.constant 79 : index
      %197 = memref.load %arg2[%c79] : memref<98xf32, #tpu.memory_space<smem>>
      %198 = vector.broadcast %197 : f32 to vector<2x256xf32>
      %199 = arith.mulf %198, %161 : vector<2x256xf32>
      %200 = arith.addf %196, %199 : vector<2x256xf32>
      %201 = arith.addf %133, %200 : vector<2x256xf32>
      %c37 = arith.constant 37 : index
      %202 = memref.load %arg2[%c37] : memref<98xf32, #tpu.memory_space<smem>>
      %203 = vector.broadcast %202 : f32 to vector<2x256xf32>
      %204 = arith.mulf %203, %156 : vector<2x256xf32>
      %c86 = arith.constant 86 : index
      %205 = memref.load %arg2[%c86] : memref<98xf32, #tpu.memory_space<smem>>
      %206 = vector.broadcast %205 : f32 to vector<2x256xf32>
      %207 = arith.mulf %206, %161 : vector<2x256xf32>
      %208 = arith.addf %204, %207 : vector<2x256xf32>
      %209 = arith.addf %141, %208 : vector<2x256xf32>
      %c44 = arith.constant 44 : index
      %210 = memref.load %arg2[%c44] : memref<98xf32, #tpu.memory_space<smem>>
      %211 = vector.broadcast %210 : f32 to vector<2x256xf32>
      %212 = arith.mulf %211, %156 : vector<2x256xf32>
      %c93 = arith.constant 93 : index
      %213 = memref.load %arg2[%c93] : memref<98xf32, #tpu.memory_space<smem>>
      %214 = vector.broadcast %213 : f32 to vector<2x256xf32>
      %215 = arith.mulf %214, %161 : vector<2x256xf32>
      %216 = arith.addf %212, %215 : vector<2x256xf32>
      %217 = arith.addf %149, %216 : vector<2x256xf32>
      %c3 = arith.constant 3 : index
      %218 = memref.load %arg2[%c3] : memref<98xf32, #tpu.memory_space<smem>>
      %219 = vector.broadcast %218 : f32 to vector<2x256xf32>
      %220 = arith.mulf %219, %14 : vector<2x256xf32>
      %c52 = arith.constant 52 : index
      %221 = memref.load %arg2[%c52] : memref<98xf32, #tpu.memory_space<smem>>
      %222 = vector.broadcast %221 : f32 to vector<2x256xf32>
      %223 = arith.mulf %222, %15 : vector<2x256xf32>
      %224 = arith.addf %220, %223 : vector<2x256xf32>
      %225 = arith.addf %169, %224 : vector<2x256xf32>
      %c10 = arith.constant 10 : index
      %226 = memref.load %arg2[%c10] : memref<98xf32, #tpu.memory_space<smem>>
      %227 = vector.broadcast %226 : f32 to vector<2x256xf32>
      %228 = arith.mulf %227, %14 : vector<2x256xf32>
      %c59 = arith.constant 59 : index
      %229 = memref.load %arg2[%c59] : memref<98xf32, #tpu.memory_space<smem>>
      %230 = vector.broadcast %229 : f32 to vector<2x256xf32>
      %231 = arith.mulf %230, %15 : vector<2x256xf32>
      %232 = arith.addf %228, %231 : vector<2x256xf32>
      %233 = arith.addf %177, %232 : vector<2x256xf32>
      %c17 = arith.constant 17 : index
      %234 = memref.load %arg2[%c17] : memref<98xf32, #tpu.memory_space<smem>>
      %235 = vector.broadcast %234 : f32 to vector<2x256xf32>
      %236 = arith.mulf %235, %14 : vector<2x256xf32>
      %c66 = arith.constant 66 : index
      %237 = memref.load %arg2[%c66] : memref<98xf32, #tpu.memory_space<smem>>
      %238 = vector.broadcast %237 : f32 to vector<2x256xf32>
      %239 = arith.mulf %238, %15 : vector<2x256xf32>
      %240 = arith.addf %236, %239 : vector<2x256xf32>
      %241 = arith.addf %185, %240 : vector<2x256xf32>
      %c24 = arith.constant 24 : index
      %242 = memref.load %arg2[%c24] : memref<98xf32, #tpu.memory_space<smem>>
      %243 = vector.broadcast %242 : f32 to vector<2x256xf32>
      %244 = arith.mulf %243, %14 : vector<2x256xf32>
      %c73 = arith.constant 73 : index
      %245 = memref.load %arg2[%c73] : memref<98xf32, #tpu.memory_space<smem>>
      %246 = vector.broadcast %245 : f32 to vector<2x256xf32>
      %247 = arith.mulf %246, %15 : vector<2x256xf32>
      %248 = arith.addf %244, %247 : vector<2x256xf32>
      %249 = arith.addf %193, %248 : vector<2x256xf32>
      %c31 = arith.constant 31 : index
      %250 = memref.load %arg2[%c31] : memref<98xf32, #tpu.memory_space<smem>>
      %251 = vector.broadcast %250 : f32 to vector<2x256xf32>
      %252 = arith.mulf %251, %14 : vector<2x256xf32>
      %c80 = arith.constant 80 : index
      %253 = memref.load %arg2[%c80] : memref<98xf32, #tpu.memory_space<smem>>
      %254 = vector.broadcast %253 : f32 to vector<2x256xf32>
      %255 = arith.mulf %254, %15 : vector<2x256xf32>
      %256 = arith.addf %252, %255 : vector<2x256xf32>
      %257 = arith.addf %201, %256 : vector<2x256xf32>
      %c38 = arith.constant 38 : index
      %258 = memref.load %arg2[%c38] : memref<98xf32, #tpu.memory_space<smem>>
      %259 = vector.broadcast %258 : f32 to vector<2x256xf32>
      %260 = arith.mulf %259, %14 : vector<2x256xf32>
      %c87 = arith.constant 87 : index
      %261 = memref.load %arg2[%c87] : memref<98xf32, #tpu.memory_space<smem>>
      %262 = vector.broadcast %261 : f32 to vector<2x256xf32>
      %263 = arith.mulf %262, %15 : vector<2x256xf32>
      %264 = arith.addf %260, %263 : vector<2x256xf32>
      %265 = arith.addf %209, %264 : vector<2x256xf32>
      %c45 = arith.constant 45 : index
      %266 = memref.load %arg2[%c45] : memref<98xf32, #tpu.memory_space<smem>>
      %267 = vector.broadcast %266 : f32 to vector<2x256xf32>
      %268 = arith.mulf %267, %14 : vector<2x256xf32>
      %c94 = arith.constant 94 : index
      %269 = memref.load %arg2[%c94] : memref<98xf32, #tpu.memory_space<smem>>
      %270 = vector.broadcast %269 : f32 to vector<2x256xf32>
      %271 = arith.mulf %270, %15 : vector<2x256xf32>
      %272 = arith.addf %268, %271 : vector<2x256xf32>
      %273 = arith.addf %217, %272 : vector<2x256xf32>
      %c15_i32_26 = arith.constant 15 : i32
      %274 = vector.broadcast %c15_i32_26 : i32 to vector<1x256xi32>
      %275 = arith.cmpi slt, %18, %274 : vector<1x256xi32>
      %c255_i32 = arith.constant 255 : i32
      %276 = tpu.dynamic_rotate %14 by %c255_i32 dim 1 : vector<2x256xf32>, i32 -> vector<2x256xf32>
      %cst_27 = arith.constant 0.000000e+00 : f32
      %277 = vector.shape_cast %275 : vector<1x256xi1> to vector<1x256xi1>
      %278 = vector.broadcast %277 : vector<1x256xi1> to vector<2x256xi1>
      %279 = vector.broadcast %cst_27 : f32 to vector<2x256xf32>
      %280 = arith.select %278, %276, %279 : vector<2x256xi1>, vector<2x256xf32>
      %c255_i32_28 = arith.constant 255 : i32
      %281 = tpu.dynamic_rotate %15 by %c255_i32_28 dim 1 : vector<2x256xf32>, i32 -> vector<2x256xf32>
      %cst_29 = arith.constant 0.000000e+00 : f32
      %282 = vector.shape_cast %275 : vector<1x256xi1> to vector<1x256xi1>
      %283 = vector.broadcast %282 : vector<1x256xi1> to vector<2x256xi1>
      %284 = vector.broadcast %cst_29 : f32 to vector<2x256xf32>
      %285 = arith.select %283, %281, %284 : vector<2x256xi1>, vector<2x256xf32>
      %c4 = arith.constant 4 : index
      %286 = memref.load %arg2[%c4] : memref<98xf32, #tpu.memory_space<smem>>
      %287 = vector.broadcast %286 : f32 to vector<2x256xf32>
      %288 = arith.mulf %287, %280 : vector<2x256xf32>
      %c53 = arith.constant 53 : index
      %289 = memref.load %arg2[%c53] : memref<98xf32, #tpu.memory_space<smem>>
      %290 = vector.broadcast %289 : f32 to vector<2x256xf32>
      %291 = arith.mulf %290, %285 : vector<2x256xf32>
      %292 = arith.addf %288, %291 : vector<2x256xf32>
      %293 = arith.addf %225, %292 : vector<2x256xf32>
      %c11 = arith.constant 11 : index
      %294 = memref.load %arg2[%c11] : memref<98xf32, #tpu.memory_space<smem>>
      %295 = vector.broadcast %294 : f32 to vector<2x256xf32>
      %296 = arith.mulf %295, %280 : vector<2x256xf32>
      %c60 = arith.constant 60 : index
      %297 = memref.load %arg2[%c60] : memref<98xf32, #tpu.memory_space<smem>>
      %298 = vector.broadcast %297 : f32 to vector<2x256xf32>
      %299 = arith.mulf %298, %285 : vector<2x256xf32>
      %300 = arith.addf %296, %299 : vector<2x256xf32>
      %301 = arith.addf %233, %300 : vector<2x256xf32>
      %c18 = arith.constant 18 : index
      %302 = memref.load %arg2[%c18] : memref<98xf32, #tpu.memory_space<smem>>
      %303 = vector.broadcast %302 : f32 to vector<2x256xf32>
      %304 = arith.mulf %303, %280 : vector<2x256xf32>
      %c67 = arith.constant 67 : index
      %305 = memref.load %arg2[%c67] : memref<98xf32, #tpu.memory_space<smem>>
      %306 = vector.broadcast %305 : f32 to vector<2x256xf32>
      %307 = arith.mulf %306, %285 : vector<2x256xf32>
      %308 = arith.addf %304, %307 : vector<2x256xf32>
      %309 = arith.addf %241, %308 : vector<2x256xf32>
      %c25 = arith.constant 25 : index
      %310 = memref.load %arg2[%c25] : memref<98xf32, #tpu.memory_space<smem>>
      %311 = vector.broadcast %310 : f32 to vector<2x256xf32>
      %312 = arith.mulf %311, %280 : vector<2x256xf32>
      %c74 = arith.constant 74 : index
      %313 = memref.load %arg2[%c74] : memref<98xf32, #tpu.memory_space<smem>>
      %314 = vector.broadcast %313 : f32 to vector<2x256xf32>
      %315 = arith.mulf %314, %285 : vector<2x256xf32>
      %316 = arith.addf %312, %315 : vector<2x256xf32>
      %317 = arith.addf %249, %316 : vector<2x256xf32>
      %c32 = arith.constant 32 : index
      %318 = memref.load %arg2[%c32] : memref<98xf32, #tpu.memory_space<smem>>
      %319 = vector.broadcast %318 : f32 to vector<2x256xf32>
      %320 = arith.mulf %319, %280 : vector<2x256xf32>
      %c81 = arith.constant 81 : index
      %321 = memref.load %arg2[%c81] : memref<98xf32, #tpu.memory_space<smem>>
      %322 = vector.broadcast %321 : f32 to vector<2x256xf32>
      %323 = arith.mulf %322, %285 : vector<2x256xf32>
      %324 = arith.addf %320, %323 : vector<2x256xf32>
      %325 = arith.addf %257, %324 : vector<2x256xf32>
      %c39 = arith.constant 39 : index
      %326 = memref.load %arg2[%c39] : memref<98xf32, #tpu.memory_space<smem>>
      %327 = vector.broadcast %326 : f32 to vector<2x256xf32>
      %328 = arith.mulf %327, %280 : vector<2x256xf32>
      %c88 = arith.constant 88 : index
      %329 = memref.load %arg2[%c88] : memref<98xf32, #tpu.memory_space<smem>>
      %330 = vector.broadcast %329 : f32 to vector<2x256xf32>
      %331 = arith.mulf %330, %285 : vector<2x256xf32>
      %332 = arith.addf %328, %331 : vector<2x256xf32>
      %333 = arith.addf %265, %332 : vector<2x256xf32>
      %c46 = arith.constant 46 : index
      %334 = memref.load %arg2[%c46] : memref<98xf32, #tpu.memory_space<smem>>
      %335 = vector.broadcast %334 : f32 to vector<2x256xf32>
      %336 = arith.mulf %335, %280 : vector<2x256xf32>
      %c95 = arith.constant 95 : index
      %337 = memref.load %arg2[%c95] : memref<98xf32, #tpu.memory_space<smem>>
      %338 = vector.broadcast %337 : f32 to vector<2x256xf32>
      %339 = arith.mulf %338, %285 : vector<2x256xf32>
      %340 = arith.addf %336, %339 : vector<2x256xf32>
      %341 = arith.addf %273, %340 : vector<2x256xf32>
      %c14_i32 = arith.constant 14 : i32
      %342 = vector.broadcast %c14_i32 : i32 to vector<1x256xi32>
      %343 = arith.cmpi slt, %18, %342 : vector<1x256xi32>
      %c254_i32 = arith.constant 254 : i32
      %344 = tpu.dynamic_rotate %14 by %c254_i32 dim 1 : vector<2x256xf32>, i32 -> vector<2x256xf32>
      %cst_30 = arith.constant 0.000000e+00 : f32
      %345 = vector.shape_cast %343 : vector<1x256xi1> to vector<1x256xi1>
      %346 = vector.broadcast %345 : vector<1x256xi1> to vector<2x256xi1>
      %347 = vector.broadcast %cst_30 : f32 to vector<2x256xf32>
      %348 = arith.select %346, %344, %347 : vector<2x256xi1>, vector<2x256xf32>
      %c254_i32_31 = arith.constant 254 : i32
      %349 = tpu.dynamic_rotate %15 by %c254_i32_31 dim 1 : vector<2x256xf32>, i32 -> vector<2x256xf32>
      %cst_32 = arith.constant 0.000000e+00 : f32
      %350 = vector.shape_cast %343 : vector<1x256xi1> to vector<1x256xi1>
      %351 = vector.broadcast %350 : vector<1x256xi1> to vector<2x256xi1>
      %352 = vector.broadcast %cst_32 : f32 to vector<2x256xf32>
      %353 = arith.select %351, %349, %352 : vector<2x256xi1>, vector<2x256xf32>
      %c5 = arith.constant 5 : index
      %354 = memref.load %arg2[%c5] : memref<98xf32, #tpu.memory_space<smem>>
      %355 = vector.broadcast %354 : f32 to vector<2x256xf32>
      %356 = arith.mulf %355, %348 : vector<2x256xf32>
      %c54 = arith.constant 54 : index
      %357 = memref.load %arg2[%c54] : memref<98xf32, #tpu.memory_space<smem>>
      %358 = vector.broadcast %357 : f32 to vector<2x256xf32>
      %359 = arith.mulf %358, %353 : vector<2x256xf32>
      %360 = arith.addf %356, %359 : vector<2x256xf32>
      %361 = arith.addf %293, %360 : vector<2x256xf32>
      %c12 = arith.constant 12 : index
      %362 = memref.load %arg2[%c12] : memref<98xf32, #tpu.memory_space<smem>>
      %363 = vector.broadcast %362 : f32 to vector<2x256xf32>
      %364 = arith.mulf %363, %348 : vector<2x256xf32>
      %c61 = arith.constant 61 : index
      %365 = memref.load %arg2[%c61] : memref<98xf32, #tpu.memory_space<smem>>
      %366 = vector.broadcast %365 : f32 to vector<2x256xf32>
      %367 = arith.mulf %366, %353 : vector<2x256xf32>
      %368 = arith.addf %364, %367 : vector<2x256xf32>
      %369 = arith.addf %301, %368 : vector<2x256xf32>
      %c19 = arith.constant 19 : index
      %370 = memref.load %arg2[%c19] : memref<98xf32, #tpu.memory_space<smem>>
      %371 = vector.broadcast %370 : f32 to vector<2x256xf32>
      %372 = arith.mulf %371, %348 : vector<2x256xf32>
      %c68 = arith.constant 68 : index
      %373 = memref.load %arg2[%c68] : memref<98xf32, #tpu.memory_space<smem>>
      %374 = vector.broadcast %373 : f32 to vector<2x256xf32>
      %375 = arith.mulf %374, %353 : vector<2x256xf32>
      %376 = arith.addf %372, %375 : vector<2x256xf32>
      %377 = arith.addf %309, %376 : vector<2x256xf32>
      %c26 = arith.constant 26 : index
      %378 = memref.load %arg2[%c26] : memref<98xf32, #tpu.memory_space<smem>>
      %379 = vector.broadcast %378 : f32 to vector<2x256xf32>
      %380 = arith.mulf %379, %348 : vector<2x256xf32>
      %c75 = arith.constant 75 : index
      %381 = memref.load %arg2[%c75] : memref<98xf32, #tpu.memory_space<smem>>
      %382 = vector.broadcast %381 : f32 to vector<2x256xf32>
      %383 = arith.mulf %382, %353 : vector<2x256xf32>
      %384 = arith.addf %380, %383 : vector<2x256xf32>
      %385 = arith.addf %317, %384 : vector<2x256xf32>
      %c33 = arith.constant 33 : index
      %386 = memref.load %arg2[%c33] : memref<98xf32, #tpu.memory_space<smem>>
      %387 = vector.broadcast %386 : f32 to vector<2x256xf32>
      %388 = arith.mulf %387, %348 : vector<2x256xf32>
      %c82 = arith.constant 82 : index
      %389 = memref.load %arg2[%c82] : memref<98xf32, #tpu.memory_space<smem>>
      %390 = vector.broadcast %389 : f32 to vector<2x256xf32>
      %391 = arith.mulf %390, %353 : vector<2x256xf32>
      %392 = arith.addf %388, %391 : vector<2x256xf32>
      %393 = arith.addf %325, %392 : vector<2x256xf32>
      %c40 = arith.constant 40 : index
      %394 = memref.load %arg2[%c40] : memref<98xf32, #tpu.memory_space<smem>>
      %395 = vector.broadcast %394 : f32 to vector<2x256xf32>
      %396 = arith.mulf %395, %348 : vector<2x256xf32>
      %c89 = arith.constant 89 : index
      %397 = memref.load %arg2[%c89] : memref<98xf32, #tpu.memory_space<smem>>
      %398 = vector.broadcast %397 : f32 to vector<2x256xf32>
      %399 = arith.mulf %398, %353 : vector<2x256xf32>
      %400 = arith.addf %396, %399 : vector<2x256xf32>
      %401 = arith.addf %333, %400 : vector<2x256xf32>
      %c47 = arith.constant 47 : index
      %402 = memref.load %arg2[%c47] : memref<98xf32, #tpu.memory_space<smem>>
      %403 = vector.broadcast %402 : f32 to vector<2x256xf32>
      %404 = arith.mulf %403, %348 : vector<2x256xf32>
      %c96 = arith.constant 96 : index
      %405 = memref.load %arg2[%c96] : memref<98xf32, #tpu.memory_space<smem>>
      %406 = vector.broadcast %405 : f32 to vector<2x256xf32>
      %407 = arith.mulf %406, %353 : vector<2x256xf32>
      %408 = arith.addf %404, %407 : vector<2x256xf32>
      %409 = arith.addf %341, %408 : vector<2x256xf32>
      %c13_i32 = arith.constant 13 : i32
      %410 = vector.broadcast %c13_i32 : i32 to vector<1x256xi32>
      %411 = arith.cmpi slt, %18, %410 : vector<1x256xi32>
      %c253_i32 = arith.constant 253 : i32
      %412 = tpu.dynamic_rotate %14 by %c253_i32 dim 1 : vector<2x256xf32>, i32 -> vector<2x256xf32>
      %cst_33 = arith.constant 0.000000e+00 : f32
      %413 = vector.shape_cast %411 : vector<1x256xi1> to vector<1x256xi1>
      %414 = vector.broadcast %413 : vector<1x256xi1> to vector<2x256xi1>
      %415 = vector.broadcast %cst_33 : f32 to vector<2x256xf32>
      %416 = arith.select %414, %412, %415 : vector<2x256xi1>, vector<2x256xf32>
      %c253_i32_34 = arith.constant 253 : i32
      %417 = tpu.dynamic_rotate %15 by %c253_i32_34 dim 1 : vector<2x256xf32>, i32 -> vector<2x256xf32>
      %cst_35 = arith.constant 0.000000e+00 : f32
      %418 = vector.shape_cast %411 : vector<1x256xi1> to vector<1x256xi1>
      %419 = vector.broadcast %418 : vector<1x256xi1> to vector<2x256xi1>
      %420 = vector.broadcast %cst_35 : f32 to vector<2x256xf32>
      %421 = arith.select %419, %417, %420 : vector<2x256xi1>, vector<2x256xf32>
      %c6 = arith.constant 6 : index
      %422 = memref.load %arg2[%c6] : memref<98xf32, #tpu.memory_space<smem>>
      %423 = vector.broadcast %422 : f32 to vector<2x256xf32>
      %424 = arith.mulf %423, %416 : vector<2x256xf32>
      %c55 = arith.constant 55 : index
      %425 = memref.load %arg2[%c55] : memref<98xf32, #tpu.memory_space<smem>>
      %426 = vector.broadcast %425 : f32 to vector<2x256xf32>
      %427 = arith.mulf %426, %421 : vector<2x256xf32>
      %428 = arith.addf %424, %427 : vector<2x256xf32>
      %429 = arith.addf %361, %428 : vector<2x256xf32>
      %c13 = arith.constant 13 : index
      %430 = memref.load %arg2[%c13] : memref<98xf32, #tpu.memory_space<smem>>
      %431 = vector.broadcast %430 : f32 to vector<2x256xf32>
      %432 = arith.mulf %431, %416 : vector<2x256xf32>
      %c62 = arith.constant 62 : index
      %433 = memref.load %arg2[%c62] : memref<98xf32, #tpu.memory_space<smem>>
      %434 = vector.broadcast %433 : f32 to vector<2x256xf32>
      %435 = arith.mulf %434, %421 : vector<2x256xf32>
      %436 = arith.addf %432, %435 : vector<2x256xf32>
      %437 = arith.addf %369, %436 : vector<2x256xf32>
      %c20 = arith.constant 20 : index
      %438 = memref.load %arg2[%c20] : memref<98xf32, #tpu.memory_space<smem>>
      %439 = vector.broadcast %438 : f32 to vector<2x256xf32>
      %440 = arith.mulf %439, %416 : vector<2x256xf32>
      %c69 = arith.constant 69 : index
      %441 = memref.load %arg2[%c69] : memref<98xf32, #tpu.memory_space<smem>>
      %442 = vector.broadcast %441 : f32 to vector<2x256xf32>
      %443 = arith.mulf %442, %421 : vector<2x256xf32>
      %444 = arith.addf %440, %443 : vector<2x256xf32>
      %445 = arith.addf %377, %444 : vector<2x256xf32>
      %c27 = arith.constant 27 : index
      %446 = memref.load %arg2[%c27] : memref<98xf32, #tpu.memory_space<smem>>
      %447 = vector.broadcast %446 : f32 to vector<2x256xf32>
      %448 = arith.mulf %447, %416 : vector<2x256xf32>
      %c76 = arith.constant 76 : index
      %449 = memref.load %arg2[%c76] : memref<98xf32, #tpu.memory_space<smem>>
      %450 = vector.broadcast %449 : f32 to vector<2x256xf32>
      %451 = arith.mulf %450, %421 : vector<2x256xf32>
      %452 = arith.addf %448, %451 : vector<2x256xf32>
      %453 = arith.addf %385, %452 : vector<2x256xf32>
      %c34 = arith.constant 34 : index
      %454 = memref.load %arg2[%c34] : memref<98xf32, #tpu.memory_space<smem>>
      %455 = vector.broadcast %454 : f32 to vector<2x256xf32>
      %456 = arith.mulf %455, %416 : vector<2x256xf32>
      %c83 = arith.constant 83 : index
      %457 = memref.load %arg2[%c83] : memref<98xf32, #tpu.memory_space<smem>>
      %458 = vector.broadcast %457 : f32 to vector<2x256xf32>
      %459 = arith.mulf %458, %421 : vector<2x256xf32>
      %460 = arith.addf %456, %459 : vector<2x256xf32>
      %461 = arith.addf %393, %460 : vector<2x256xf32>
      %c41 = arith.constant 41 : index
      %462 = memref.load %arg2[%c41] : memref<98xf32, #tpu.memory_space<smem>>
      %463 = vector.broadcast %462 : f32 to vector<2x256xf32>
      %464 = arith.mulf %463, %416 : vector<2x256xf32>
      %c90 = arith.constant 90 : index
      %465 = memref.load %arg2[%c90] : memref<98xf32, #tpu.memory_space<smem>>
      %466 = vector.broadcast %465 : f32 to vector<2x256xf32>
      %467 = arith.mulf %466, %421 : vector<2x256xf32>
      %468 = arith.addf %464, %467 : vector<2x256xf32>
      %469 = arith.addf %401, %468 : vector<2x256xf32>
      %c48 = arith.constant 48 : index
      %470 = memref.load %arg2[%c48] : memref<98xf32, #tpu.memory_space<smem>>
      %471 = vector.broadcast %470 : f32 to vector<2x256xf32>
      %472 = arith.mulf %471, %416 : vector<2x256xf32>
      %c97 = arith.constant 97 : index
      %473 = memref.load %arg2[%c97] : memref<98xf32, #tpu.memory_space<smem>>
      %474 = vector.broadcast %473 : f32 to vector<2x256xf32>
      %475 = arith.mulf %474, %421 : vector<2x256xf32>
      %476 = arith.addf %472, %475 : vector<2x256xf32>
      %477 = arith.addf %409, %476 : vector<2x256xf32>
      %c3_i32_36 = arith.constant 3 : i32
      %478 = vector.broadcast %c3_i32_36 : i32 to vector<1x256xi32>
      %479 = arith.cmpi sge, %20, %478 : vector<1x256xi32>
      %c48_i32 = arith.constant 48 : i32
      %480 = tpu.dynamic_rotate %429 by %c48_i32 dim 1 : vector<2x256xf32>, i32 -> vector<2x256xf32>
      %cst_37 = arith.constant 0.000000e+00 : f32
      %481 = vector.shape_cast %479 : vector<1x256xi1> to vector<1x256xi1>
      %482 = vector.broadcast %481 : vector<1x256xi1> to vector<2x256xi1>
      %483 = vector.broadcast %cst_37 : f32 to vector<2x256xf32>
      %484 = arith.select %482, %480, %483 : vector<2x256xi1>, vector<2x256xf32>
      %c2_i32_38 = arith.constant 2 : i32
      %485 = vector.broadcast %c2_i32_38 : i32 to vector<1x256xi32>
      %486 = arith.cmpi sge, %20, %485 : vector<1x256xi32>
      %c32_i32 = arith.constant 32 : i32
      %487 = tpu.dynamic_rotate %437 by %c32_i32 dim 1 : vector<2x256xf32>, i32 -> vector<2x256xf32>
      %cst_39 = arith.constant 0.000000e+00 : f32
      %488 = vector.shape_cast %486 : vector<1x256xi1> to vector<1x256xi1>
      %489 = vector.broadcast %488 : vector<1x256xi1> to vector<2x256xi1>
      %490 = vector.broadcast %cst_39 : f32 to vector<2x256xf32>
      %491 = arith.select %489, %487, %490 : vector<2x256xi1>, vector<2x256xf32>
      %492 = arith.addf %484, %491 : vector<2x256xf32>
      %c1_i32_40 = arith.constant 1 : i32
      %493 = vector.broadcast %c1_i32_40 : i32 to vector<1x256xi32>
      %494 = arith.cmpi sge, %20, %493 : vector<1x256xi32>
      %c16_i32 = arith.constant 16 : i32
      %495 = tpu.dynamic_rotate %445 by %c16_i32 dim 1 : vector<2x256xf32>, i32 -> vector<2x256xf32>
      %cst_41 = arith.constant 0.000000e+00 : f32
      %496 = vector.shape_cast %494 : vector<1x256xi1> to vector<1x256xi1>
      %497 = vector.broadcast %496 : vector<1x256xi1> to vector<2x256xi1>
      %498 = vector.broadcast %cst_41 : f32 to vector<2x256xf32>
      %499 = arith.select %497, %495, %498 : vector<2x256xi1>, vector<2x256xf32>
      %500 = arith.addf %492, %499 : vector<2x256xf32>
      %501 = arith.addf %500, %453 : vector<2x256xf32>
      %c15_i32_42 = arith.constant 15 : i32
      %502 = vector.broadcast %c15_i32_42 : i32 to vector<1x256xi32>
      %503 = arith.cmpi slt, %20, %502 : vector<1x256xi32>
      %c240_i32 = arith.constant 240 : i32
      %504 = tpu.dynamic_rotate %461 by %c240_i32 dim 1 : vector<2x256xf32>, i32 -> vector<2x256xf32>
      %cst_43 = arith.constant 0.000000e+00 : f32
      %505 = vector.shape_cast %503 : vector<1x256xi1> to vector<1x256xi1>
      %506 = vector.broadcast %505 : vector<1x256xi1> to vector<2x256xi1>
      %507 = vector.broadcast %cst_43 : f32 to vector<2x256xf32>
      %508 = arith.select %506, %504, %507 : vector<2x256xi1>, vector<2x256xf32>
      %509 = arith.addf %501, %508 : vector<2x256xf32>
      %c14_i32_44 = arith.constant 14 : i32
      %510 = vector.broadcast %c14_i32_44 : i32 to vector<1x256xi32>
      %511 = arith.cmpi slt, %20, %510 : vector<1x256xi32>
      %c224_i32 = arith.constant 224 : i32
      %512 = tpu.dynamic_rotate %469 by %c224_i32 dim 1 : vector<2x256xf32>, i32 -> vector<2x256xf32>
      %cst_45 = arith.constant 0.000000e+00 : f32
      %513 = vector.shape_cast %511 : vector<1x256xi1> to vector<1x256xi1>
      %514 = vector.broadcast %513 : vector<1x256xi1> to vector<2x256xi1>
      %515 = vector.broadcast %cst_45 : f32 to vector<2x256xf32>
      %516 = arith.select %514, %512, %515 : vector<2x256xi1>, vector<2x256xf32>
      %517 = arith.addf %509, %516 : vector<2x256xf32>
      %c13_i32_46 = arith.constant 13 : i32
      %518 = vector.broadcast %c13_i32_46 : i32 to vector<1x256xi32>
      %519 = arith.cmpi slt, %20, %518 : vector<1x256xi32>
      %c208_i32 = arith.constant 208 : i32
      %520 = tpu.dynamic_rotate %477 by %c208_i32 dim 1 : vector<2x256xf32>, i32 -> vector<2x256xf32>
      %cst_47 = arith.constant 0.000000e+00 : f32
      %521 = vector.shape_cast %519 : vector<1x256xi1> to vector<1x256xi1>
      %522 = vector.broadcast %521 : vector<1x256xi1> to vector<2x256xi1>
      %523 = vector.broadcast %cst_47 : f32 to vector<2x256xf32>
      %524 = arith.select %522, %520, %523 : vector<2x256xi1>, vector<2x256xf32>
      %525 = arith.addf %517, %524 : vector<2x256xf32>
      %526 = arith.negf %525 : vector<2x256xf32>
      %527 = math.exp %526 : vector<2x256xf32>
      %cst_48 = arith.constant 1.000000e+00 : f32
      %528 = vector.broadcast %cst_48 : f32 to vector<2x256xf32>
      %529 = arith.addf %528, %527 : vector<2x256xf32>
      %530 = arith.divf %528, %529 : vector<2x256xf32>
      %c0_49 = arith.constant 0 : index
      %c0_50 = arith.constant 0 : index
      %531 = vector.load %arg4[%c0_49, %c0_50] : memref<2x256xf32, #tpu.memory_space<vmem>>, vector<2x256xf32>
      tpu.vector_store %arg4[%c0_49, %c0_50], %530 {strides = array<i32>} : memref<2x256xf32, #tpu.memory_space<vmem>>, vector<2x256xf32>,
    } else {
    }
    return
  }
  func.func @transform_0(%arg0: i32, %arg1: i32) -> i32 {
    %c0_i32 = arith.constant 0 : i32
    %c0_i32_0 = arith.constant 0 : i32
    return %c0_i32 : i32
  }
  func.func @transform_1(%arg0: i32, %arg1: i32) -> (i32, i32, i32) {
    %c0_i32 = arith.constant 0 : i32
    %c0_i32_0 = arith.constant 0 : i32
    return %arg0, %arg1, %c0_i32 : i32, i32, i32
  }
  func.func @transform_2(%arg0: i32, %arg1: i32) -> (i32, i32) {
    %c0_i32 = arith.constant 0 : i32
    %c0_i32_0 = arith.constant 0 : i32
    return %arg0, %c0_i32 : i32, i32
  }
}

</mosaic_0001>

<llo_original>
// kernel: tpu_custom_call.1
$region0: #{tpu_custom_call.1}
  #allocation0 [shape = 'u32[]', space=smem, size = 0x4, offset = 0x4, fixed_abs, tag = 'smem constant byte address 0x4 - core index']
  #allocation1 [shape = 'u32[144,128]{1,0:T(1,128)}', space=vmem, size = 0x12000, scoped, tag = 'internal scratch']
  #allocation2 [shape = 'f32[2,256]{1,0:T(2,128)}', space=vmem, size = 0x800, scoped, tag = 'scratch operand']
  #allocation3 [shape = 'f32[2,256]{1,0:T(2,128)}', space=vmem, size = 0x800, scoped, tag = 'scratch operand']
  %s0 = inlined_call_operand.hbm [shape: f32[98], index: 0, kind: input, shape index: {}]
  %s1 = inlined_call_operand.hbm [shape: f32[2,4,256], index: 1, kind: input, shape index: {}]
  %s2 = inlined_call_operand.hbm [shape: f32[2,256], index: 2, kind: output, shape index: {}]
  %s3 = sld [smem:[#allocation0]]
  $region38: #{tpu_custom_call.1} parent=0
    _
  %s5 = ssub.s32 1, %s3
  %s6 = scalar_select 0, %s5, %s3
  $region1: #{tpu_custom_call.1} parent=0
    #allocation4 [shape = 'u8[512]{0}', space=smem, size = 0x200, scoped, tag = 'input window, operand 0, single buffered']
    #allocation5 [shape = 's32[1]{0}', space=sflag, size = 0x4, scoped, tag = 'scoped memory for tpu_custom_call.1']
    #allocation6 [shape = 's32[1]{0}', space=sflag, size = 0x4, scoped, tag = 'scoped memory for tpu_custom_call.1']
    #allocation7 [shape = 's32[1]{0}', space=sflag, size = 0x4, scoped, tag = 'scoped memory for tpu_custom_call.1']
    #allocation8 [shape = 'u8[8192]{0}', space=vmem, size = 0x2000, scoped, tag = 'input window, operand 1, single buffered']
    #allocation9 [shape = 'u8[2048]{0}', space=vmem, size = 0x800, scoped, tag = 'output window, operand 0, single buffered']
    %7 = vsyncpa [#allocation7], 0
    %8 = vsyncpa [#allocation5], 0
    %9 = vsyncpa [#allocation6], 0
    // Predicated region
    $region2: #{tpu_custom_call.1} parent=1 // pred_check
      _
    $region3: #{tpu_custom_call.1} parent=1 // pred_check_branch
      %11 = sbr.rel (0) target = $region5
    $region4: #{tpu_custom_call.1} parent=1 // pred_region
      %s13 = ssub.s32 16, 16
      %14 = vsyncadd [#allocation7], %s13
      %17 = dma.hbm_to_smem %s0, 16, [#allocation4], [#allocation7]
    $region5: #{tpu_custom_call.1} parent=1 // pred_fallthru
      _
    // Predicated region
    $region6: #{tpu_custom_call.1} parent=1 // pred_check
      _
    $region7: #{tpu_custom_call.1} parent=1 // pred_check_branch
      %19 = sbr.rel (0) target = $region9
    $region8: #{tpu_custom_call.1} parent=1 // pred_region
      %s21 = ssub.s32 256, 256
      %22 = vsyncadd [#allocation5], %s21
      %s23 = sshll.u32 [#allocation8], 4
      %s24 = int_to_ptr.vmem [resolvable:$true] %s23
      %29 = dma.hbm_to_vmem [thread:$0]  %s1, 256, %s24, [#allocation5], 128, 128, 8
    $region9: #{tpu_custom_call.1} parent=1 // pred_fallthru
      _
    // Predicated region
    $region10: #{tpu_custom_call.1} parent=1 // pred_check
      _
    $region11: #{tpu_custom_call.1} parent=1 // pred_check_branch
      %31 = sbr.rel (0) target = $region13
    $region12: #{tpu_custom_call.1} parent=1 // pred_region
      %32 = dma.done [#allocation7], 16
    $region13: #{tpu_custom_call.1} parent=1 // pred_fallthru
      _
    // Predicated region
    $region14: #{tpu_custom_call.1} parent=1 // pred_check
      _
    $region15: #{tpu_custom_call.1} parent=1 // pred_check_branch
      %34 = sbr.rel (0) target = $region17
    $region16: #{tpu_custom_call.1} parent=1 // pred_region
      %35 = dma.done [#allocation5], 256
    $region17: #{tpu_custom_call.1} parent=1 // pred_fallthru
      _
    %36 = sfence
    %v37 = vld [vmem:[#allocation8] sm:$0xff]
    %v38 = vld [vmem:[#allocation8 + $0x8] sm:$0xff]
    %v41 = vcombine.high %v37, %v37
    %v42 = vcombine.high %v38, %v38
    %vm45 = vcmask 1043456
    %v46 = vsel %vm45, %v37, 0.0
    %v47 = vrot.slane %v46, 4
    %v48 = vadd.f32 %v46, %v47
    %v49 = vrot.slane %v48, 2
    %v50 = vadd.f32 %v48, %v49
    %v51 = vrot.slane %v50, 1
    %v52 = vadd.f32 %v50, %v51
    %v53 = vsel %vm45, %v41, 0.0
    %v54 = vrot.slane %v53, 4
    %v55 = vadd.f32 %v53, %v54
    %v56 = vrot.slane %v55, 2
    %v57 = vadd.f32 %v55, %v56
    %v58 = vrot.slane %v57, 1
    %v59 = vadd.f32 %v57, %v58
    %v60 = vsel %vm45, %v38, 0.0
    %v61 = vrot.slane %v60, 4
    %v62 = vadd.f32 %v60, %v61
    %v63 = vrot.slane %v62, 2
    %v64 = vadd.f32 %v62, %v63
    %v65 = vrot.slane %v64, 1
    %v66 = vadd.f32 %v64, %v65
    %v67 = vsel %vm45, %v42, 0.0
    %v68 = vrot.slane %v67, 4
    %v69 = vadd.f32 %v67, %v68
    %v70 = vrot.slane %v69, 2
    %v71 = vadd.f32 %v69, %v70
    %v72 = vrot.slane %v71, 1
    %v73 = vadd.f32 %v71, %v72
    %v74 = vsel %vm45, %v37, -inf
    %v75 = vrot.slane %v74, 4
    %v76 = vmax.f32 %v74, %v75
    %v77 = vrot.slane %v76, 2
    %v78 = vmax.f32 %v76, %v77
    %v79 = vrot.slane %v78, 1
    %v80 = vmax.f32 %v78, %v79
    %v81 = vsel %vm45, %v41, -inf
    %v82 = vrot.slane %v81, 4
    %v83 = vmax.f32 %v81, %v82
    %v84 = vrot.slane %v83, 2
    %v85 = vmax.f32 %v83, %v84
    %v86 = vrot.slane %v85, 1
    %v87 = vmax.f32 %v85, %v86
    %v88 = vsel %vm45, %v38, -inf
    %v89 = vrot.slane %v88, 4
    %v90 = vmax.f32 %v88, %v89
    %v91 = vrot.slane %v90, 2
    %v92 = vmax.f32 %v90, %v91
    %v93 = vrot.slane %v92, 1
    %v94 = vmax.f32 %v92, %v93
    %v95 = vsel %vm45, %v42, -inf
    %v96 = vrot.slane %v95, 4
    %v97 = vmax.f32 %v95, %v96
    %v98 = vrot.slane %v97, 2
    %v99 = vmax.f32 %v97, %v98
    %v100 = vrot.slane %v99, 1
    %v101 = vmax.f32 %v99, %v100
    %p102 = scmp.eq.s32.totalorder 0, 0
    // Predicated region
    $region18: #{tpu_custom_call.1} parent=1 // pred_check
      %p103 = pneg %p102
    $region19: #{tpu_custom_call.1} parent=1 // pred_check_branch
      %105 = sbr.rel (%p103) target = $region21
    $region20: #{tpu_custom_call.1} parent=1 // pred_region
      %v110 = vcombine.low %v52, %v59
      %v112 = vunpack.c.l.s4 1983009808
      %v113 = vunpack.c.0.s8 %v112
      %v114 = vlaneseq
      %v115 = vshrl.u32 %v114, 7
      %v116 = vsub.s32 %v113, %v115
      %v117 = vrot.slane %v110, %v116
      %v118 = vcombine.low %v66, %v73
      %v120 = vunpack.c.l.s4 1983009808
      %v121 = vunpack.c.0.s8 %v120
      %v122 = vlaneseq
      %v123 = vshrl.u32 %v122, 7
      %v124 = vsub.s32 %v121, %v123
      %v125 = vrot.slane %v118, %v124
      %vm126 = vcmask 1044484
      %v127 = vsel %vm126, %v117, %v117
      %vm128 = vcmask 1046534
      %v129 = vsel %vm128, %v117, %v127
      %v130 = vrot.slane %v125, 7
      %vm131 = vcmask 1041409
      %v132 = vsel %vm131, %v130, %v129
      %vm133 = vcmask 1043459
      %v134 = vsel %vm133, %v130, %v132
      %vm135 = vcmask 1045509
      %v136 = vsel %vm135, %v130, %v134
      %vm137 = vcmask 1047559
      %v138 = vsel %vm137, %v130, %v136
      %140 = vst [vmem:[#allocation2] sm:$0xf] %v138
      %v145 = vcombine.low %v80, %v87
      %v147 = vunpack.c.l.s4 1983009808
      %v148 = vunpack.c.0.s8 %v147
      %v149 = vlaneseq
      %v150 = vshrl.u32 %v149, 7
      %v151 = vsub.s32 %v148, %v150
      %v152 = vrot.slane %v145, %v151
      %v153 = vcombine.low %v94, %v101
      %v155 = vunpack.c.l.s4 1983009808
      %v156 = vunpack.c.0.s8 %v155
      %v157 = vlaneseq
      %v158 = vshrl.u32 %v157, 7
      %v159 = vsub.s32 %v156, %v158
      %v160 = vrot.slane %v153, %v159
      %v161 = vsel %vm126, %v152, %v152
      %v162 = vsel %vm128, %v152, %v161
      %v163 = vrot.slane %v160, 7
      %v164 = vsel %vm131, %v163, %v162
      %v165 = vsel %vm133, %v163, %v164
      %v166 = vsel %vm135, %v163, %v165
      %v167 = vsel %vm137, %v163, %v166
      %169 = vst [vmem:[#allocation3] sm:$0xf] %v167
    $region21: #{tpu_custom_call.1} parent=1 // pred_fallthru
      _
    %p170 = scmp.ne.s32.totalorder 0, 0
    // Predicated region
    $region22: #{tpu_custom_call.1} parent=1 // pred_check
      %p171 = pneg %p170
    $region23: #{tpu_custom_call.1} parent=1 // pred_check_branch
      %173 = sbr.rel (%p171) target = $region25
    $region24: #{tpu_custom_call.1} parent=1 // pred_region
      %v174 = vld [vmem:[#allocation2] sm:$0xf]
      %v179 = vcombine.low %v52, %v59
      %v181 = vunpack.c.l.s4 1983009808
      %v182 = vunpack.c.0.s8 %v181
      %v183 = vlaneseq
      %v184 = vshrl.u32 %v183, 7
      %v185 = vsub.s32 %v182, %v184
      %v186 = vrot.slane %v179, %v185
      %v187 = vcombine.low %v66, %v73
      %v189 = vunpack.c.l.s4 1983009808
      %v190 = vunpack.c.0.s8 %v189
      %v191 = vlaneseq
      %v192 = vshrl.u32 %v191, 7
      %v193 = vsub.s32 %v190, %v192
      %v194 = vrot.slane %v187, %v193
      %vm195 = vcmask 1044484
      %v196 = vsel %vm195, %v186, %v186
      %vm197 = vcmask 1046534
      %v198 = vsel %vm197, %v186, %v196
      %v199 = vrot.slane %v194, 7
      %vm200 = vcmask 1041409
      %v201 = vsel %vm200, %v199, %v198
      %vm202 = vcmask 1043459
      %v203 = vsel %vm202, %v199, %v201
      %vm204 = vcmask 1045509
      %v205 = vsel %vm204, %v199, %v203
      %vm206 = vcmask 1047559
      %v207 = vsel %vm206, %v199, %v205
      %v209 = vadd.f32 %v174, %v207
      %210 = vst [vmem:[#allocation2] sm:$0xf] %v209
      %v211 = vld [vmem:[#allocation3] sm:$0xf]
      %v216 = vcombine.low %v80, %v87
      %v218 = vunpack.c.l.s4 1983009808
      %v219 = vunpack.c.0.s8 %v218
      %v220 = vlaneseq
      %v221 = vshrl.u32 %v220, 7
      %v222 = vsub.s32 %v219, %v221
      %v223 = vrot.slane %v216, %v222
      %v224 = vcombine.low %v94, %v101
      %v226 = vunpack.c.l.s4 1983009808
      %v227 = vunpack.c.0.s8 %v226
      %v228 = vlaneseq
      %v229 = vshrl.u32 %v228, 7
      %v230 = vsub.s32 %v227, %v229
      %v231 = vrot.slane %v224, %v230
      %v232 = vsel %vm195, %v223, %v223
      %v233 = vsel %vm197, %v223, %v232
      %v234 = vrot.slane %v231, 7
      %v235 = vsel %vm200, %v234, %v233
      %v236 = vsel %vm202, %v234, %v235
      %v237 = vsel %vm204, %v234, %v236
      %v238 = vsel %vm206, %v234, %v237
      %v240 = vmax.f32 %v211, %v238
      %241 = vst [vmem:[#allocation3] sm:$0xf] %v240
    $region25: #{tpu_custom_call.1} parent=1 // pred_fallthru
      _
    // Predicated region
    $region26: #{tpu_custom_call.1} parent=1 // pred_check
      %p242 = pneg %p102
    $region27: #{tpu_custom_call.1} parent=1 // pred_check_branch
      %244 = sbr.rel (%p242) target = $region29
    $region28: #{tpu_custom_call.1} parent=1 // pred_region
      %v245 = vld [vmem:[#allocation2] sm:$0xf]
      %v246 = vmul.f32 %v245, 0.25
      %v247 = vld [vmem:[#allocation3] sm:$0xf]
      %v248 = vlaneseq
      %v249 = vand.u32 %v248, 127
      %v250 = vadd.s32 %v249, 128
      %v251 = vand.u32 %v249, 15
      %v252 = vand.u32 %v250, 15
      %v253 = vshra.s32 %v249, 4
      %v254 = vshra.s32 %v250, 4
      %vm255 = vcmp.ge.s32.totalorder %v251, 3
      %vm256 = vcmp.ge.s32.totalorder %v252, 3
      %v259 = vunpack.c.l.s4 1983009808
      %v260 = vunpack.c.0.s8 %v259
      %v261 = vlaneseq
      %v262 = vshrl.u32 %v261, 7
      %v263 = vsub.s32 %v260, %v262
      %v264 = vrot.slane %v246, %v263
      %v265 = vcombine.high %v264, %v264
      %268 = vrot.lane.b32.xlu0 %v264, 3
      %v269 = vpop.permute.xlu0 %268
      %270 = vrot.lane.b32.xlu0 %v265, 3
      %v271 = vpop.permute.xlu0 %270
      %vm272 = vcmp.lt.s32.totalorder %v249, 3
      %v273 = vsel %vm272, %v269, %v271
      %v274 = vsel %vm272, %v271, %v269
      %v275 = vsel %vm255, 1, 0
      %v276 = vsel %vm256, 1, 0
      %vm277 = vcmp.eq.s32.totalorder %v275, 1
      %vm278 = vcmp.eq.s32.totalorder %v276, 1
      %v279 = vsel %vm277, %v274, 0.0
      %v280 = vsel %vm278, %v273, 0.0
      %v283 = vunpack.c.l.s4 1983009808
      %v284 = vunpack.c.0.s8 %v283
      %v285 = vlaneseq
      %v286 = vshrl.u32 %v285, 7
      %v287 = vsub.s32 %v284, %v286
      %v288 = vrot.slane %v247, %v287
      %v289 = vcombine.high %v288, %v288
      %292 = vrot.lane.b32.xlu0 %v288, 3
      %v293 = vpop.permute.xlu0 %292
      %294 = vrot.lane.b32.xlu0 %v289, 3
      %v295 = vpop.permute.xlu0 %294
      %v296 = vsel %vm272, %v293, %v295
      %v297 = vsel %vm272, %v295, %v293
      %v298 = vsel %vm277, %v297, 0.0
      %v299 = vsel %vm278, %v296, 0.0
      %s300 = sld [smem:[#allocation4]]
      %v301 = vstv %s300
      %v302 = vmul.f32 %v301, %v279
      %v303 = vmul.f32 %v301, %v280
      %s304 = sld [smem:[#allocation4 + $0x31]]
      %v305 = vstv %s304
      %v306 = vmul.f32 %v305, %v298
      %v307 = vmul.f32 %v305, %v299
      %v308 = vadd.f32 %v302, %v306
      %v309 = vadd.f32 %v303, %v307
      %s310 = sld [smem:[#allocation4 + $0x7]]
      %v311 = vstv %s310
      %v312 = vmul.f32 %v311, %v279
      %v313 = vmul.f32 %v311, %v280
      %s314 = sld [smem:[#allocation4 + $0x38]]
      %v315 = vstv %s314
      %v316 = vmul.f32 %v315, %v298
      %v317 = vmul.f32 %v315, %v299
      %v318 = vadd.f32 %v312, %v316
      %v319 = vadd.f32 %v313, %v317
      %s320 = sld [smem:[#allocation4 + $0xe]]
      %v321 = vstv %s320
      %v322 = vmul.f32 %v321, %v279
      %v323 = vmul.f32 %v321, %v280
      %s324 = sld [smem:[#allocation4 + $0x3f]]
      %v325 = vstv %s324
      %v326 = vmul.f32 %v325, %v298
      %v327 = vmul.f32 %v325, %v299
      %v328 = vadd.f32 %v322, %v326
      %v329 = vadd.f32 %v323, %v327
      %s330 = sld [smem:[#allocation4 + $0x15]]
      %v331 = vstv %s330
      %v332 = vmul.f32 %v331, %v279
      %v333 = vmul.f32 %v331, %v280
      %s334 = sld [smem:[#allocation4 + $0x46]]
      %v335 = vstv %s334
      %v336 = vmul.f32 %v335, %v298
      %v337 = vmul.f32 %v335, %v299
      %v338 = vadd.f32 %v332, %v336
      %v339 = vadd.f32 %v333, %v337
      %s340 = sld [smem:[#allocation4 + $0x1c]]
      %v341 = vstv %s340
      %v342 = vmul.f32 %v341, %v279
      %v343 = vmul.f32 %v341, %v280
      %s344 = sld [smem:[#allocation4 + $0x4d]]
      %v345 = vstv %s344
      %v346 = vmul.f32 %v345, %v298
      %v347 = vmul.f32 %v345, %v299
      %v348 = vadd.f32 %v342, %v346
      %v349 = vadd.f32 %v343, %v347
      %s350 = sld [smem:[#allocation4 + $0x23]]
      %v351 = vstv %s350
      %v352 = vmul.f32 %v351, %v279
      %v353 = vmul.f32 %v351, %v280
      %s354 = sld [smem:[#allocation4 + $0x54]]
      %v355 = vstv %s354
      %v356 = vmul.f32 %v355, %v298
      %v357 = vmul.f32 %v355, %v299
      %v358 = vadd.f32 %v352, %v356
      %v359 = vadd.f32 %v353, %v357
      %s360 = sld [smem:[#allocation4 + $0x2a]]
      %v361 = vstv %s360
      %v362 = vmul.f32 %v361, %v279
      %v363 = vmul.f32 %v361, %v280
      %s364 = sld [smem:[#allocation4 + $0x5b]]
      %v365 = vstv %s364
      %v366 = vmul.f32 %v365, %v298
      %v367 = vmul.f32 %v365, %v299
      %v368 = vadd.f32 %v362, %v366
      %v369 = vadd.f32 %v363, %v367
      %vm370 = vcmp.ge.s32.totalorder %v251, 2
      %vm371 = vcmp.ge.s32.totalorder %v252, 2
      %372 = vrot.lane.b32.xlu0 %v264, 2
      %v373 = vpop.permute.xlu0 %372
      %374 = vrot.lane.b32.xlu0 %v265, 2
      %v375 = vpop.permute.xlu0 %374
      %vm376 = vcmp.lt.s32.totalorder %v249, 2
      %v377 = vsel %vm376, %v373, %v375
      %v378 = vsel %vm376, %v375, %v373
      %v379 = vsel %vm370, 1, 0
      %v380 = vsel %vm371, 1, 0
      %vm381 = vcmp.eq.s32.totalorder %v379, 1
      %vm382 = vcmp.eq.s32.totalorder %v380, 1
      %v383 = vsel %vm381, %v378, 0.0
      %v384 = vsel %vm382, %v377, 0.0
      %385 = vrot.lane.b32.xlu0 %v288, 2
      %v386 = vpop.permute.xlu0 %385
      %387 = vrot.lane.b32.xlu0 %v289, 2
      %v388 = vpop.permute.xlu0 %387
      %v389 = vsel %vm376, %v386, %v388
      %v390 = vsel %vm376, %v388, %v386
      %v391 = vsel %vm381, %v390, 0.0
      %v392 = vsel %vm382, %v389, 0.0
      %s393 = sld [smem:[#allocation4 + $0x1]]
      %v394 = vstv %s393
      %v395 = vmul.f32 %v394, %v383
      %v396 = vmul.f32 %v394, %v384
      %s397 = sld [smem:[#allocation4 + $0x32]]
      %v398 = vstv %s397
      %v399 = vmul.f32 %v398, %v391
      %v400 = vmul.f32 %v398, %v392
      %v401 = vadd.f32 %v395, %v399
      %v402 = vadd.f32 %v396, %v400
      %v403 = vadd.f32 %v308, %v401
      %v404 = vadd.f32 %v309, %v402
      %s405 = sld [smem:[#allocation4 + $0x8]]
      %v406 = vstv %s405
      %v407 = vmul.f32 %v406, %v383
      %v408 = vmul.f32 %v406, %v384
      %s409 = sld [smem:[#allocation4 + $0x39]]
      %v410 = vstv %s409
      %v411 = vmul.f32 %v410, %v391
      %v412 = vmul.f32 %v410, %v392
      %v413 = vadd.f32 %v407, %v411
      %v414 = vadd.f32 %v408, %v412
      %v415 = vadd.f32 %v318, %v413
      %v416 = vadd.f32 %v319, %v414
      %s417 = sld [smem:[#allocation4 + $0xf]]
      %v418 = vstv %s417
      %v419 = vmul.f32 %v418, %v383
      %v420 = vmul.f32 %v418, %v384
      %s421 = sld [smem:[#allocation4 + $0x40]]
      %v422 = vstv %s421
      %v423 = vmul.f32 %v422, %v391
      %v424 = vmul.f32 %v422, %v392
      %v425 = vadd.f32 %v419, %v423
      %v426 = vadd.f32 %v420, %v424
      %v427 = vadd.f32 %v328, %v425
      %v428 = vadd.f32 %v329, %v426
      %s429 = sld [smem:[#allocation4 + $0x16]]
      %v430 = vstv %s429
      %v431 = vmul.f32 %v430, %v383
      %v432 = vmul.f32 %v430, %v384
      %s433 = sld [smem:[#allocation4 + $0x47]]
      %v434 = vstv %s433
      %v435 = vmul.f32 %v434, %v391
      %v436 = vmul.f32 %v434, %v392
      %v437 = vadd.f32 %v431, %v435
      %v438 = vadd.f32 %v432, %v436
      %v439 = vadd.f32 %v338, %v437
      %v440 = vadd.f32 %v339, %v438
      %s441 = sld [smem:[#allocation4 + $0x1d]]
      %v442 = vstv %s441
      %v443 = vmul.f32 %v442, %v383
      %v444 = vmul.f32 %v442, %v384
      %s445 = sld [smem:[#allocation4 + $0x4e]]
      %v446 = vstv %s445
      %v447 = vmul.f32 %v446, %v391
      %v448 = vmul.f32 %v446, %v392
      %v449 = vadd.f32 %v443, %v447
      %v450 = vadd.f32 %v444, %v448
      %v451 = vadd.f32 %v348, %v449
      %v452 = vadd.f32 %v349, %v450
      %s453 = sld [smem:[#allocation4 + $0x24]]
      %v454 = vstv %s453
      %v455 = vmul.f32 %v454, %v383
      %v456 = vmul.f32 %v454, %v384
      %s457 = sld [smem:[#allocation4 + $0x55]]
      %v458 = vstv %s457
      %v459 = vmul.f32 %v458, %v391
      %v460 = vmul.f32 %v458, %v392
      %v461 = vadd.f32 %v455, %v459
      %v462 = vadd.f32 %v456, %v460
      %v463 = vadd.f32 %v358, %v461
      %v464 = vadd.f32 %v359, %v462
      %s465 = sld [smem:[#allocation4 + $0x2b]]
      %v466 = vstv %s465
      %v467 = vmul.f32 %v466, %v383
      %v468 = vmul.f32 %v466, %v384
      %s469 = sld [smem:[#allocation4 + $0x5c]]
      %v470 = vstv %s469
      %v471 = vmul.f32 %v470, %v391
      %v472 = vmul.f32 %v470, %v392
      %v473 = vadd.f32 %v467, %v471
      %v474 = vadd.f32 %v468, %v472
      %v475 = vadd.f32 %v368, %v473
      %v476 = vadd.f32 %v369, %v474
      %vm477 = vcmp.ge.s32.totalorder %v251, 1
      %vm478 = vcmp.ge.s32.totalorder %v252, 1
      %479 = vrot.lane.b32.xlu0 %v264, 1
      %v480 = vpop.permute.xlu0 %479
      %481 = vrot.lane.b32.xlu0 %v265, 1
      %v482 = vpop.permute.xlu0 %481
      %vm483 = vcmp.lt.s32.totalorder %v249, 1
      %v484 = vsel %vm483, %v480, %v482
      %v485 = vsel %vm483, %v482, %v480
      %v486 = vsel %vm477, 1, 0
      %v487 = vsel %vm478, 1, 0
      %vm488 = vcmp.eq.s32.totalorder %v486, 1
      %vm489 = vcmp.eq.s32.totalorder %v487, 1
      %v490 = vsel %vm488, %v485, 0.0
      %v491 = vsel %vm489, %v484, 0.0
      %492 = vrot.lane.b32.xlu0 %v288, 1
      %v493 = vpop.permute.xlu0 %492
      %494 = vrot.lane.b32.xlu0 %v289, 1
      %v495 = vpop.permute.xlu0 %494
      %v496 = vsel %vm483, %v493, %v495
      %v497 = vsel %vm483, %v495, %v493
      %v498 = vsel %vm488, %v497, 0.0
      %v499 = vsel %vm489, %v496, 0.0
      %s500 = sld [smem:[#allocation4 + $0x2]]
      %v501 = vstv %s500
      %v502 = vmul.f32 %v501, %v490
      %v503 = vmul.f32 %v501, %v491
      %s504 = sld [smem:[#allocation4 + $0x33]]
      %v505 = vstv %s504
      %v506 = vmul.f32 %v505, %v498
      %v507 = vmul.f32 %v505, %v499
      %v508 = vadd.f32 %v502, %v506
      %v509 = vadd.f32 %v503, %v507
      %v510 = vadd.f32 %v403, %v508
      %v511 = vadd.f32 %v404, %v509
      %s512 = sld [smem:[#allocation4 + $0x9]]
      %v513 = vstv %s512
      %v514 = vmul.f32 %v513, %v490
      %v515 = vmul.f32 %v513, %v491
      %s516 = sld [smem:[#allocation4 + $0x3a]]
      %v517 = vstv %s516
      %v518 = vmul.f32 %v517, %v498
      %v519 = vmul.f32 %v517, %v499
      %v520 = vadd.f32 %v514, %v518
      %v521 = vadd.f32 %v515, %v519
      %v522 = vadd.f32 %v415, %v520
      %v523 = vadd.f32 %v416, %v521
      %s524 = sld [smem:[#allocation4 + $0x10]]
      %v525 = vstv %s524
      %v526 = vmul.f32 %v525, %v490
      %v527 = vmul.f32 %v525, %v491
      %s528 = sld [smem:[#allocation4 + $0x41]]
      %v529 = vstv %s528
      %v530 = vmul.f32 %v529, %v498
      %v531 = vmul.f32 %v529, %v499
      %v532 = vadd.f32 %v526, %v530
      %v533 = vadd.f32 %v527, %v531
      %v534 = vadd.f32 %v427, %v532
      %v535 = vadd.f32 %v428, %v533
      %s536 = sld [smem:[#allocation4 + $0x17]]
      %v537 = vstv %s536
      %v538 = vmul.f32 %v537, %v490
      %v539 = vmul.f32 %v537, %v491
      %s540 = sld [smem:[#allocation4 + $0x48]]
      %v541 = vstv %s540
      %v542 = vmul.f32 %v541, %v498
      %v543 = vmul.f32 %v541, %v499
      %v544 = vadd.f32 %v538, %v542
      %v545 = vadd.f32 %v539, %v543
      %v546 = vadd.f32 %v439, %v544
      %v547 = vadd.f32 %v440, %v545
      %s548 = sld [smem:[#allocation4 + $0x1e]]
      %v549 = vstv %s548
      %v550 = vmul.f32 %v549, %v490
      %v551 = vmul.f32 %v549, %v491
      %s552 = sld [smem:[#allocation4 + $0x4f]]
      %v553 = vstv %s552
      %v554 = vmul.f32 %v553, %v498
      %v555 = vmul.f32 %v553, %v499
      %v556 = vadd.f32 %v550, %v554
      %v557 = vadd.f32 %v551, %v555
      %v558 = vadd.f32 %v451, %v556
      %v559 = vadd.f32 %v452, %v557
      %s560 = sld [smem:[#allocation4 + $0x25]]
      %v561 = vstv %s560
      %v562 = vmul.f32 %v561, %v490
      %v563 = vmul.f32 %v561, %v491
      %s564 = sld [smem:[#allocation4 + $0x56]]
      %v565 = vstv %s564
      %v566 = vmul.f32 %v565, %v498
      %v567 = vmul.f32 %v565, %v499
      %v568 = vadd.f32 %v562, %v566
      %v569 = vadd.f32 %v563, %v567
      %v570 = vadd.f32 %v463, %v568
      %v571 = vadd.f32 %v464, %v569
      %s572 = sld [smem:[#allocation4 + $0x2c]]
      %v573 = vstv %s572
      %v574 = vmul.f32 %v573, %v490
      %v575 = vmul.f32 %v573, %v491
      %s576 = sld [smem:[#allocation4 + $0x5d]]
      %v577 = vstv %s576
      %v578 = vmul.f32 %v577, %v498
      %v579 = vmul.f32 %v577, %v499
      %v580 = vadd.f32 %v574, %v578
      %v581 = vadd.f32 %v575, %v579
      %v582 = vadd.f32 %v475, %v580
      %v583 = vadd.f32 %v476, %v581
      %s584 = sld [smem:[#allocation4 + $0x3]]
      %v585 = vstv %s584
      %v586 = vmul.f32 %v585, %v246
      %s587 = sld [smem:[#allocation4 + $0x34]]
      %v588 = vstv %s587
      %v589 = vmul.f32 %v588, %v247
      %v590 = vadd.f32 %v586, %v589
      %v593 = vunpack.c.l.s4 1983009808
      %v594 = vunpack.c.0.s8 %v593
      %v595 = vlaneseq
      %v596 = vshrl.u32 %v595, 7
      %v597 = vsub.s32 %v594, %v596
      %v598 = vrot.slane %v590, %v597
      %v599 = vcombine.high %v598, %v598
      %v602 = vadd.f32 %v510, %v598
      %v603 = vadd.f32 %v511, %v599
      %s604 = sld [smem:[#allocation4 + $0xa]]
      %v605 = vstv %s604
      %v606 = vmul.f32 %v605, %v246
      %s607 = sld [smem:[#allocation4 + $0x3b]]
      %v608 = vstv %s607
      %v609 = vmul.f32 %v608, %v247
      %v610 = vadd.f32 %v606, %v609
      %v613 = vunpack.c.l.s4 1983009808
      %v614 = vunpack.c.0.s8 %v613
      %v615 = vlaneseq
      %v616 = vshrl.u32 %v615, 7
      %v617 = vsub.s32 %v614, %v616
      %v618 = vrot.slane %v610, %v617
      %v619 = vcombine.high %v618, %v618
      %v622 = vadd.f32 %v522, %v618
      %v623 = vadd.f32 %v523, %v619
      %s624 = sld [smem:[#allocation4 + $0x11]]
      %v625 = vstv %s624
      %v626 = vmul.f32 %v625, %v246
      %s627 = sld [smem:[#allocation4 + $0x42]]
      %v628 = vstv %s627
      %v629 = vmul.f32 %v628, %v247
      %v630 = vadd.f32 %v626, %v629
      %v633 = vunpack.c.l.s4 1983009808
      %v634 = vunpack.c.0.s8 %v633
      %v635 = vlaneseq
      %v636 = vshrl.u32 %v635, 7
      %v637 = vsub.s32 %v634, %v636
      %v638 = vrot.slane %v630, %v637
      %v639 = vcombine.high %v638, %v638
      %v642 = vadd.f32 %v534, %v638
      %v643 = vadd.f32 %v535, %v639
      %s644 = sld [smem:[#allocation4 + $0x18]]
      %v645 = vstv %s644
      %v646 = vmul.f32 %v645, %v246
      %s647 = sld [smem:[#allocation4 + $0x49]]
      %v648 = vstv %s647
      %v649 = vmul.f32 %v648, %v247
      %v650 = vadd.f32 %v646, %v649
      %v653 = vunpack.c.l.s4 1983009808
      %v654 = vunpack.c.0.s8 %v653
      %v655 = vlaneseq
      %v656 = vshrl.u32 %v655, 7
      %v657 = vsub.s32 %v654, %v656
      %v658 = vrot.slane %v650, %v657
      %v659 = vcombine.high %v658, %v658
      %v662 = vadd.f32 %v546, %v658
      %v663 = vadd.f32 %v547, %v659
      %s664 = sld [smem:[#allocation4 + $0x1f]]
      %v665 = vstv %s664
      %v666 = vmul.f32 %v665, %v246
      %s667 = sld [smem:[#allocation4 + $0x50]]
      %v668 = vstv %s667
      %v669 = vmul.f32 %v668, %v247
      %v670 = vadd.f32 %v666, %v669
      %v673 = vunpack.c.l.s4 1983009808
      %v674 = vunpack.c.0.s8 %v673
      %v675 = vlaneseq
      %v676 = vshrl.u32 %v675, 7
      %v677 = vsub.s32 %v674, %v676
      %v678 = vrot.slane %v670, %v677
      %v679 = vcombine.high %v678, %v678
      %v682 = vadd.f32 %v558, %v678
      %v683 = vadd.f32 %v559, %v679
      %s684 = sld [smem:[#allocation4 + $0x26]]
      %v685 = vstv %s684
      %v686 = vmul.f32 %v685, %v246
      %s687 = sld [smem:[#allocation4 + $0x57]]
      %v688 = vstv %s687
      %v689 = vmul.f32 %v688, %v247
      %v690 = vadd.f32 %v686, %v689
      %v693 = vunpack.c.l.s4 1983009808
      %v694 = vunpack.c.0.s8 %v693
      %v695 = vlaneseq
      %v696 = vshrl.u32 %v695, 7
      %v697 = vsub.s32 %v694, %v696
      %v698 = vrot.slane %v690, %v697
      %v699 = vcombine.high %v698, %v698
      %v702 = vadd.f32 %v570, %v698
      %v703 = vadd.f32 %v571, %v699
      %s704 = sld [smem:[#allocation4 + $0x2d]]
      %v705 = vstv %s704
      %v706 = vmul.f32 %v705, %v246
      %s707 = sld [smem:[#allocation4 + $0x5e]]
      %v708 = vstv %s707
      %v709 = vmul.f32 %v708, %v247
      %v710 = vadd.f32 %v706, %v709
      %v713 = vunpack.c.l.s4 1983009808
      %v714 = vunpack.c.0.s8 %v713
      %v715 = vlaneseq
      %v716 = vshrl.u32 %v715, 7
      %v717 = vsub.s32 %v714, %v716
      %v718 = vrot.slane %v710, %v717
      %v719 = vcombine.high %v718, %v718
      %v722 = vadd.f32 %v582, %v718
      %v723 = vadd.f32 %v583, %v719
      %vm724 = vcmp.lt.s32.totalorder %v251, 15
      %vm725 = vcmp.lt.s32.totalorder %v252, 15
      %726 = vrot.lane.b32.xlu0 %v264, 127
      %v727 = vpop.permute.xlu0 %726
      %728 = vrot.lane.b32.xlu0 %v265, 127
      %v729 = vpop.permute.xlu0 %728
      %vm730 = vcmp.lt.s32.totalorder %v249, 127
      %v731 = vsel %vm730, %v727, %v729
      %v732 = vsel %vm730, %v729, %v727
      %v733 = vsel %vm724, 1, 0
      %v734 = vsel %vm725, 1, 0
      %vm735 = vcmp.eq.s32.totalorder %v733, 1
      %vm736 = vcmp.eq.s32.totalorder %v734, 1
      %v737 = vsel %vm735, %v731, 0.0
      %v738 = vsel %vm736, %v732, 0.0
      %739 = vrot.lane.b32.xlu0 %v288, 127
      %v740 = vpop.permute.xlu0 %739
      %741 = vrot.lane.b32.xlu0 %v289, 127
      %v742 = vpop.permute.xlu0 %741
      %v743 = vsel %vm730, %v740, %v742
      %v744 = vsel %vm730, %v742, %v740
      %v745 = vsel %vm735, %v743, 0.0
      %v746 = vsel %vm736, %v744, 0.0
      %s747 = sld [smem:[#allocation4 + $0x4]]
      %v748 = vstv %s747
      %v749 = vmul.f32 %v748, %v737
      %v750 = vmul.f32 %v748, %v738
      %s751 = sld [smem:[#allocation4 + $0x35]]
      %v752 = vstv %s751
      %v753 = vmul.f32 %v752, %v745
      %v754 = vmul.f32 %v752, %v746
      %v755 = vadd.f32 %v749, %v753
      %v756 = vadd.f32 %v750, %v754
      %v757 = vadd.f32 %v602, %v755
      %v758 = vadd.f32 %v603, %v756
      %s759 = sld [smem:[#allocation4 + $0xb]]
      %v760 = vstv %s759
      %v761 = vmul.f32 %v760, %v737
      %v762 = vmul.f32 %v760, %v738
      %s763 = sld [smem:[#allocation4 + $0x3c]]
      %v764 = vstv %s763
      %v765 = vmul.f32 %v764, %v745
      %v766 = vmul.f32 %v764, %v746
      %v767 = vadd.f32 %v761, %v765
      %v768 = vadd.f32 %v762, %v766
      %v769 = vadd.f32 %v622, %v767
      %v770 = vadd.f32 %v623, %v768
      %s771 = sld [smem:[#allocation4 + $0x12]]
      %v772 = vstv %s771
      %v773 = vmul.f32 %v772, %v737
      %v774 = vmul.f32 %v772, %v738
      %s775 = sld [smem:[#allocation4 + $0x43]]
      %v776 = vstv %s775
      %v777 = vmul.f32 %v776, %v745
      %v778 = vmul.f32 %v776, %v746
      %v779 = vadd.f32 %v773, %v777
      %v780 = vadd.f32 %v774, %v778
      %v781 = vadd.f32 %v642, %v779
      %v782 = vadd.f32 %v643, %v780
      %s783 = sld [smem:[#allocation4 + $0x19]]
      %v784 = vstv %s783
      %v785 = vmul.f32 %v784, %v737
      %v786 = vmul.f32 %v784, %v738
      %s787 = sld [smem:[#allocation4 + $0x4a]]
      %v788 = vstv %s787
      %v789 = vmul.f32 %v788, %v745
      %v790 = vmul.f32 %v788, %v746
      %v791 = vadd.f32 %v785, %v789
      %v792 = vadd.f32 %v786, %v790
      %v793 = vadd.f32 %v662, %v791
      %v794 = vadd.f32 %v663, %v792
      %s795 = sld [smem:[#allocation4 + $0x20]]
      %v796 = vstv %s795
      %v797 = vmul.f32 %v796, %v737
      %v798 = vmul.f32 %v796, %v738
      %s799 = sld [smem:[#allocation4 + $0x51]]
      %v800 = vstv %s799
      %v801 = vmul.f32 %v800, %v745
      %v802 = vmul.f32 %v800, %v746
      %v803 = vadd.f32 %v797, %v801
      %v804 = vadd.f32 %v798, %v802
      %v805 = vadd.f32 %v682, %v803
      %v806 = vadd.f32 %v683, %v804
      %s807 = sld [smem:[#allocation4 + $0x27]]
      %v808 = vstv %s807
      %v809 = vmul.f32 %v808, %v737
      %v810 = vmul.f32 %v808, %v738
      %s811 = sld [smem:[#allocation4 + $0x58]]
      %v812 = vstv %s811
      %v813 = vmul.f32 %v812, %v745
      %v814 = vmul.f32 %v812, %v746
      %v815 = vadd.f32 %v809, %v813
      %v816 = vadd.f32 %v810, %v814
      %v817 = vadd.f32 %v702, %v815
      %v818 = vadd.f32 %v703, %v816
      %s819 = sld [smem:[#allocation4 + $0x2e]]
      %v820 = vstv %s819
      %v821 = vmul.f32 %v820, %v737
      %v822 = vmul.f32 %v820, %v738
      %s823 = sld [smem:[#allocation4 + $0x5f]]
      %v824 = vstv %s823
      %v825 = vmul.f32 %v824, %v745
      %v826 = vmul.f32 %v824, %v746
      %v827 = vadd.f32 %v821, %v825
      %v828 = vadd.f32 %v822, %v826
      %v829 = vadd.f32 %v722, %v827
      %v830 = vadd.f32 %v723, %v828
      %vm831 = vcmp.lt.s32.totalorder %v251, 14
      %vm832 = vcmp.lt.s32.totalorder %v252, 14
      %833 = vrot.lane.b32.xlu0 %v264, 126
      %v834 = vpop.permute.xlu0 %833
      %835 = vrot.lane.b32.xlu0 %v265, 126
      %v836 = vpop.permute.xlu0 %835
      %vm837 = vcmp.lt.s32.totalorder %v249, 126
      %v838 = vsel %vm837, %v834, %v836
      %v839 = vsel %vm837, %v836, %v834
      %v840 = vsel %vm831, 1, 0
      %v841 = vsel %vm832, 1, 0
      %vm842 = vcmp.eq.s32.totalorder %v840, 1
      %vm843 = vcmp.eq.s32.totalorder %v841, 1
      %v844 = vsel %vm842, %v838, 0.0
      %v845 = vsel %vm843, %v839, 0.0
      %846 = vrot.lane.b32.xlu0 %v288, 126
      %v847 = vpop.permute.xlu0 %846
      %848 = vrot.lane.b32.xlu0 %v289, 126
      %v849 = vpop.permute.xlu0 %848
      %v850 = vsel %vm837, %v847, %v849
      %v851 = vsel %vm837, %v849, %v847
      %v852 = vsel %vm842, %v850, 0.0
      %v853 = vsel %vm843, %v851, 0.0
      %s854 = sld [smem:[#allocation4 + $0x5]]
      %v855 = vstv %s854
      %v856 = vmul.f32 %v855, %v844
      %v857 = vmul.f32 %v855, %v845
      %s858 = sld [smem:[#allocation4 + $0x36]]
      %v859 = vstv %s858
      %v860 = vmul.f32 %v859, %v852
      %v861 = vmul.f32 %v859, %v853
      %v862 = vadd.f32 %v856, %v860
      %v863 = vadd.f32 %v857, %v861
      %v864 = vadd.f32 %v757, %v862
      %v865 = vadd.f32 %v758, %v863
      %s866 = sld [smem:[#allocation4 + $0xc]]
      %v867 = vstv %s866
      %v868 = vmul.f32 %v867, %v844
      %v869 = vmul.f32 %v867, %v845
      %s870 = sld [smem:[#allocation4 + $0x3d]]
      %v871 = vstv %s870
      %v872 = vmul.f32 %v871, %v852
      %v873 = vmul.f32 %v871, %v853
      %v874 = vadd.f32 %v868, %v872
      %v875 = vadd.f32 %v869, %v873
      %v876 = vadd.f32 %v769, %v874
      %v877 = vadd.f32 %v770, %v875
      %s878 = sld [smem:[#allocation4 + $0x13]]
      %v879 = vstv %s878
      %v880 = vmul.f32 %v879, %v844
      %v881 = vmul.f32 %v879, %v845
      %s882 = sld [smem:[#allocation4 + $0x44]]
      %v883 = vstv %s882
      %v884 = vmul.f32 %v883, %v852
      %v885 = vmul.f32 %v883, %v853
      %v886 = vadd.f32 %v880, %v884
      %v887 = vadd.f32 %v881, %v885
      %v888 = vadd.f32 %v781, %v886
      %v889 = vadd.f32 %v782, %v887
      %s890 = sld [smem:[#allocation4 + $0x1a]]
      %v891 = vstv %s890
      %v892 = vmul.f32 %v891, %v844
      %v893 = vmul.f32 %v891, %v845
      %s894 = sld [smem:[#allocation4 + $0x4b]]
      %v895 = vstv %s894
      %v896 = vmul.f32 %v895, %v852
      %v897 = vmul.f32 %v895, %v853
      %v898 = vadd.f32 %v892, %v896
      %v899 = vadd.f32 %v893, %v897
      %v900 = vadd.f32 %v793, %v898
      %v901 = vadd.f32 %v794, %v899
      %s902 = sld [smem:[#allocation4 + $0x21]]
      %v903 = vstv %s902
      %v904 = vmul.f32 %v903, %v844
      %v905 = vmul.f32 %v903, %v845
      %s906 = sld [smem:[#allocation4 + $0x52]]
      %v907 = vstv %s906
      %v908 = vmul.f32 %v907, %v852
      %v909 = vmul.f32 %v907, %v853
      %v910 = vadd.f32 %v904, %v908
      %v911 = vadd.f32 %v905, %v909
      %v912 = vadd.f32 %v805, %v910
      %v913 = vadd.f32 %v806, %v911
      %s914 = sld [smem:[#allocation4 + $0x28]]
      %v915 = vstv %s914
      %v916 = vmul.f32 %v915, %v844
      %v917 = vmul.f32 %v915, %v845
      %s918 = sld [smem:[#allocation4 + $0x59]]
      %v919 = vstv %s918
      %v920 = vmul.f32 %v919, %v852
      %v921 = vmul.f32 %v919, %v853
      %v922 = vadd.f32 %v916, %v920
      %v923 = vadd.f32 %v917, %v921
      %v924 = vadd.f32 %v817, %v922
      %v925 = vadd.f32 %v818, %v923
      %s926 = sld [smem:[#allocation4 + $0x2f]]
      %v927 = vstv %s926
      %v928 = vmul.f32 %v927, %v844
      %v929 = vmul.f32 %v927, %v845
      %s930 = sld [smem:[#allocation4 + $0x60]]
      %v931 = vstv %s930
      %v932 = vmul.f32 %v931, %v852
      %v933 = vmul.f32 %v931, %v853
      %v934 = vadd.f32 %v928, %v932
      %v935 = vadd.f32 %v929, %v933
      %v936 = vadd.f32 %v829, %v934
      %v937 = vadd.f32 %v830, %v935
      %vm938 = vcmp.lt.s32.totalorder %v251, 13
      %vm939 = vcmp.lt.s32.totalorder %v252, 13
      %940 = vrot.lane.b32.xlu0 %v264, 125
      %v941 = vpop.permute.xlu0 %940
      %942 = vrot.lane.b32.xlu0 %v265, 125
      %v943 = vpop.permute.xlu0 %942
      %vm944 = vcmp.lt.s32.totalorder %v249, 125
      %v945 = vsel %vm944, %v941, %v943
      %v946 = vsel %vm944, %v943, %v941
      %v947 = vsel %vm938, 1, 0
      %v948 = vsel %vm939, 1, 0
      %vm949 = vcmp.eq.s32.totalorder %v947, 1
      %vm950 = vcmp.eq.s32.totalorder %v948, 1
      %v951 = vsel %vm949, %v945, 0.0
      %v952 = vsel %vm950, %v946, 0.0
      %953 = vrot.lane.b32.xlu0 %v288, 125
      %v954 = vpop.permute.xlu0 %953
      %955 = vrot.lane.b32.xlu0 %v289, 125
      %v956 = vpop.permute.xlu0 %955
      %v957 = vsel %vm944, %v954, %v956
      %v958 = vsel %vm944, %v956, %v954
      %v959 = vsel %vm949, %v957, 0.0
      %v960 = vsel %vm950, %v958, 0.0
      %s961 = sld [smem:[#allocation4 + $0x6]]
      %v962 = vstv %s961
      %v963 = vmul.f32 %v962, %v951
      %v964 = vmul.f32 %v962, %v952
      %s965 = sld [smem:[#allocation4 + $0x37]]
      %v966 = vstv %s965
      %v967 = vmul.f32 %v966, %v959
      %v968 = vmul.f32 %v966, %v960
      %v969 = vadd.f32 %v963, %v967
      %v970 = vadd.f32 %v964, %v968
      %v971 = vadd.f32 %v864, %v969
      %v972 = vadd.f32 %v865, %v970
      %s973 = sld [smem:[#allocation4 + $0xd]]
      %v974 = vstv %s973
      %v975 = vmul.f32 %v974, %v951
      %v976 = vmul.f32 %v974, %v952
      %s977 = sld [smem:[#allocation4 + $0x3e]]
      %v978 = vstv %s977
      %v979 = vmul.f32 %v978, %v959
      %v980 = vmul.f32 %v978, %v960
      %v981 = vadd.f32 %v975, %v979
      %v982 = vadd.f32 %v976, %v980
      %v983 = vadd.f32 %v876, %v981
      %v984 = vadd.f32 %v877, %v982
      %s985 = sld [smem:[#allocation4 + $0x14]]
      %v986 = vstv %s985
      %v987 = vmul.f32 %v986, %v951
      %v988 = vmul.f32 %v986, %v952
      %s989 = sld [smem:[#allocation4 + $0x45]]
      %v990 = vstv %s989
      %v991 = vmul.f32 %v990, %v959
      %v992 = vmul.f32 %v990, %v960
      %v993 = vadd.f32 %v987, %v991
      %v994 = vadd.f32 %v988, %v992
      %v995 = vadd.f32 %v888, %v993
      %v996 = vadd.f32 %v889, %v994
      %s997 = sld [smem:[#allocation4 + $0x1b]]
      %v998 = vstv %s997
      %v999 = vmul.f32 %v998, %v951
      %v1000 = vmul.f32 %v998, %v952
      %s1001 = sld [smem:[#allocation4 + $0x4c]]
      %v1002 = vstv %s1001
      %v1003 = vmul.f32 %v1002, %v959
      %v1004 = vmul.f32 %v1002, %v960
      %v1005 = vadd.f32 %v999, %v1003
      %v1006 = vadd.f32 %v1000, %v1004
      %v1007 = vadd.f32 %v900, %v1005
      %v1008 = vadd.f32 %v901, %v1006
      %s1009 = sld [smem:[#allocation4 + $0x22]]
      %v1010 = vstv %s1009
      %v1011 = vmul.f32 %v1010, %v951
      %v1012 = vmul.f32 %v1010, %v952
      %s1013 = sld [smem:[#allocation4 + $0x53]]
      %v1014 = vstv %s1013
      %v1015 = vmul.f32 %v1014, %v959
      %v1016 = vmul.f32 %v1014, %v960
      %v1017 = vadd.f32 %v1011, %v1015
      %v1018 = vadd.f32 %v1012, %v1016
      %v1019 = vadd.f32 %v912, %v1017
      %v1020 = vadd.f32 %v913, %v1018
      %s1021 = sld [smem:[#allocation4 + $0x29]]
      %v1022 = vstv %s1021
      %v1023 = vmul.f32 %v1022, %v951
      %v1024 = vmul.f32 %v1022, %v952
      %s1025 = sld [smem:[#allocation4 + $0x5a]]
      %v1026 = vstv %s1025
      %v1027 = vmul.f32 %v1026, %v959
      %v1028 = vmul.f32 %v1026, %v960
      %v1029 = vadd.f32 %v1023, %v1027
      %v1030 = vadd.f32 %v1024, %v1028
      %v1031 = vadd.f32 %v924, %v1029
      %v1032 = vadd.f32 %v925, %v1030
      %s1033 = sld [smem:[#allocation4 + $0x30]]
      %v1034 = vstv %s1033
      %v1035 = vmul.f32 %v1034, %v951
      %v1036 = vmul.f32 %v1034, %v952
      %s1037 = sld [smem:[#allocation4 + $0x61]]
      %v1038 = vstv %s1037
      %v1039 = vmul.f32 %v1038, %v959
      %v1040 = vmul.f32 %v1038, %v960
      %v1041 = vadd.f32 %v1035, %v1039
      %v1042 = vadd.f32 %v1036, %v1040
      %v1043 = vadd.f32 %v936, %v1041
      %v1044 = vadd.f32 %v937, %v1042
      %vm1045 = vcmp.ge.s32.totalorder %v253, 3
      %vm1046 = vcmp.ge.s32.totalorder %v254, 3
      %1047 = vrot.lane.b32.xlu0 %v971, 48
      %v1048 = vpop.permute.xlu0 %1047
      %1049 = vrot.lane.b32.xlu0 %v972, 48
      %v1050 = vpop.permute.xlu0 %1049
      %vm1051 = vcmp.lt.s32.totalorder %v249, 48
      %v1052 = vsel %vm1051, %v1048, %v1050
      %v1053 = vsel %vm1051, %v1050, %v1048
      %v1054 = vsel %vm1045, 1, 0
      %v1055 = vsel %vm1046, 1, 0
      %vm1056 = vcmp.eq.s32.totalorder %v1054, 1
      %vm1057 = vcmp.eq.s32.totalorder %v1055, 1
      %v1058 = vsel %vm1056, %v1053, 0.0
      %v1059 = vsel %vm1057, %v1052, 0.0
      %vm1060 = vcmp.ge.s32.totalorder %v253, 2
      %vm1061 = vcmp.ge.s32.totalorder %v254, 2
      %1062 = vrot.lane.b32.xlu0 %v983, 32
      %v1063 = vpop.permute.xlu0 %1062
      %1064 = vrot.lane.b32.xlu0 %v984, 32
      %v1065 = vpop.permute.xlu0 %1064
      %vm1066 = vcmp.lt.s32.totalorder %v249, 32
      %v1067 = vsel %vm1066, %v1063, %v1065
      %v1068 = vsel %vm1066, %v1065, %v1063
      %v1069 = vsel %vm1060, 1, 0
      %v1070 = vsel %vm1061, 1, 0
      %vm1071 = vcmp.eq.s32.totalorder %v1069, 1
      %vm1072 = vcmp.eq.s32.totalorder %v1070, 1
      %v1073 = vsel %vm1071, %v1068, 0.0
      %v1074 = vsel %vm1072, %v1067, 0.0
      %v1075 = vadd.f32 %v1058, %v1073
      %v1076 = vadd.f32 %v1059, %v1074
      %vm1077 = vcmp.ge.s32.totalorder %v253, 1
      %vm1078 = vcmp.ge.s32.totalorder %v254, 1
      %1079 = vrot.lane.b32.xlu0 %v995, 16
      %v1080 = vpop.permute.xlu0 %1079
      %1081 = vrot.lane.b32.xlu0 %v996, 16
      %v1082 = vpop.permute.xlu0 %1081
      %vm1083 = vcmp.lt.s32.totalorder %v249, 16
      %v1084 = vsel %vm1083, %v1080, %v1082
      %v1085 = vsel %vm1083, %v1082, %v1080
      %v1086 = vsel %vm1077, 1, 0
      %v1087 = vsel %vm1078, 1, 0
      %vm1088 = vcmp.eq.s32.totalorder %v1086, 1
      %vm1089 = vcmp.eq.s32.totalorder %v1087, 1
      %v1090 = vsel %vm1088, %v1085, 0.0
      %v1091 = vsel %vm1089, %v1084, 0.0
      %v1092 = vadd.f32 %v1075, %v1090
      %v1093 = vadd.f32 %v1076, %v1091
      %v1094 = vadd.f32 %v1092, %v1007
      %v1095 = vadd.f32 %v1093, %v1008
      %vm1096 = vcmp.lt.s32.totalorder %v253, 15
      %vm1097 = vcmp.lt.s32.totalorder %v254, 15
      %1098 = vrot.lane.b32.xlu0 %v1019, 112
      %v1099 = vpop.permute.xlu0 %1098
      %1100 = vrot.lane.b32.xlu0 %v1020, 112
      %v1101 = vpop.permute.xlu0 %1100
      %vm1102 = vcmp.lt.s32.totalorder %v249, 112
      %v1103 = vsel %vm1102, %v1099, %v1101
      %v1104 = vsel %vm1102, %v1101, %v1099
      %v1105 = vsel %vm1096, 1, 0
      %v1106 = vsel %vm1097, 1, 0
      %vm1107 = vcmp.eq.s32.totalorder %v1105, 1
      %vm1108 = vcmp.eq.s32.totalorder %v1106, 1
      %v1109 = vsel %vm1107, %v1103, 0.0
      %v1110 = vsel %vm1108, %v1104, 0.0
      %v1111 = vadd.f32 %v1094, %v1109
      %v1112 = vadd.f32 %v1095, %v1110
      %vm1113 = vcmp.lt.s32.totalorder %v253, 14
      %vm1114 = vcmp.lt.s32.totalorder %v254, 14
      %1115 = vrot.lane.b32.xlu0 %v1031, 96
      %v1116 = vpop.permute.xlu0 %1115
      %1117 = vrot.lane.b32.xlu0 %v1032, 96
      %v1118 = vpop.permute.xlu0 %1117
      %vm1119 = vcmp.lt.s32.totalorder %v249, 96
      %v1120 = vsel %vm1119, %v1116, %v1118
      %v1121 = vsel %vm1119, %v1118, %v1116
      %v1122 = vsel %vm1113, 1, 0
      %v1123 = vsel %vm1114, 1, 0
      %vm1124 = vcmp.eq.s32.totalorder %v1122, 1
      %vm1125 = vcmp.eq.s32.totalorder %v1123, 1
      %v1126 = vsel %vm1124, %v1120, 0.0
      %v1127 = vsel %vm1125, %v1121, 0.0
      %v1128 = vadd.f32 %v1111, %v1126
      %v1129 = vadd.f32 %v1112, %v1127
      %vm1130 = vcmp.lt.s32.totalorder %v253, 13
      %vm1131 = vcmp.lt.s32.totalorder %v254, 13
      %1132 = vrot.lane.b32.xlu0 %v1043, 80
      %v1133 = vpop.permute.xlu0 %1132
      %1134 = vrot.lane.b32.xlu0 %v1044, 80
      %v1135 = vpop.permute.xlu0 %1134
      %vm1136 = vcmp.lt.s32.totalorder %v249, 80
      %v1137 = vsel %vm1136, %v1133, %v1135
      %v1138 = vsel %vm1136, %v1135, %v1133
      %v1139 = vsel %vm1130, 1, 0
      %v1140 = vsel %vm1131, 1, 0
      %vm1141 = vcmp.eq.s32.totalorder %v1139, 1
      %vm1142 = vcmp.eq.s32.totalorder %v1140, 1
      %v1143 = vsel %vm1141, %v1137, 0.0
      %v1144 = vsel %vm1142, %v1138, 0.0
      %v1145 = vadd.f32 %v1128, %v1143
      %v1146 = vadd.f32 %v1129, %v1144
      %v1147 = vxor.u32 %v1145, 2147483648
      %v1148 = vxor.u32 %v1146, 2147483648
      %v1149 = vmul.f32 %v1147, 1.442695
      %v1150 = vpow.pop %v1149
      %v1151 = vmul.f32 %v1148, 1.442695
      %v1152 = vpow.pop %v1151
      %v1153 = vadd.f32 %v1150, 1.0
      %v1154 = vadd.f32 %v1152, 1.0
      %v1155 = vrcp.pop %v1153
      %v1156 = vmul.f32 1.0, %v1155
      %v1157 = vrcp.pop %v1154
      %v1158 = vmul.f32 1.0, %v1157
      %v1161 = vcombine.low %v1156, %v1158
      %v1163 = vunpack.c.l.s4 1983009808
      %v1164 = vunpack.c.0.s8 %v1163
      %v1165 = vlaneseq
      %v1166 = vshrl.u32 %v1165, 7
      %v1167 = vsub.s32 %v1164, %v1166
      %v1168 = vrot.slane %v1161, %v1167
      %1170 = vst [vmem:[#allocation9] sm:$0xf] %v1168
    $region29: #{tpu_custom_call.1} parent=1 // pred_fallthru
      _
    // Predicated region
    $region30: #{tpu_custom_call.1} parent=1 // pred_check
      _
    $region31: #{tpu_custom_call.1} parent=1 // pred_check_branch
      %1172 = sbr.rel (0) target = $region33
    $region32: #{tpu_custom_call.1} parent=1 // pred_region
      %s1174 = ssub.s32 64, 64
      %1175 = vsyncadd [#allocation6], %s1174
      %s1177 = sshll.u32 [#allocation9], 4
      %s1178 = int_to_ptr.vmem [resolvable:$true] %s1177
      %1180 = dma.vmem_to_hbm [thread:$0]  %s1178, 64, %s2, [#allocation6]
    $region33: #{tpu_custom_call.1} parent=1 // pred_fallthru
      _
    // Predicated region
    $region34: #{tpu_custom_call.1} parent=1 // pred_check
      _
    $region35: #{tpu_custom_call.1} parent=1 // pred_check_branch
      %1182 = sbr.rel (0) target = $region37
    $region36: #{tpu_custom_call.1} parent=1 // pred_region
      %1183 = dma.done [#allocation6], 64
    $region37: #{tpu_custom_call.1} parent=1 // pred_fallthru
      _
    %1184 = vsyncpa [#allocation5], 1
    %1185 = vsyncpa [#allocation6], 1
    %1186 = vsyncpa [#allocation7], 1

</llo_original>
